<compile_context>
chip_gen: v6e
topology: v6e:2x2x1
jax: 0.10.0
libtpu: 0.0.40
codegen_flags: <defaults>
</compile_context>

<pallas_src>
import functools

import jax
import jax.numpy as jnp
import numpy as np
from jax.experimental import pallas as pl
from jax.experimental.pallas import tpu as pltpu

_EPS = 1e-5  # nn.InstanceNorm2d default


def _conv3x3_in_relu(xpad_ref, w_ref, gb_ref, *, H, W, C):
    """One stage on a packed-lane layout.

    xpad_ref: (H+2, W*Cin) f32 VMEM scratch; rows 0 and H+1 are zero, rows
              1..H hold the activation (lane l = w*Cin + cin).
    w_ref   : (3, W*Cin, W*C) bf16 banded conv weight (one slab per ky).
    gb_ref  : (2, W*C) f32; row 0 = gamma tiled per lane, row 1 = beta tiled.
    returns : (H, W*C) f32, conv -> instance-norm -> affine -> ReLU.
    """
    WC = W * C
    inv_n = 1.0 / float(H * W)

    # --- conv3x3 as 3 MXU matmuls (ky row shifts); width taps are inside K.
    acc = jnp.zeros((H, WC), jnp.float32)
    for dy in range(3):
        lhs = xpad_ref[pl.ds(dy, H), :].astype(jnp.bfloat16)
        acc = acc + jnp.dot(lhs, w_ref[dy], preferred_element_type=jnp.float32)

    # --- InstanceNorm on the packed layout: lane l holds channel l % C.
    # Reduce across the W lane-groups / broadcast back with tiny 0/1 matmuls
    # (avoids lane<->sublane relayout reshapes).
    lane_ch = jax.lax.broadcasted_iota(jnp.int32, (WC, C), 0) % C
    col_ch = jax.lax.broadcasted_iota(jnp.int32, (WC, C), 1)
    gather_c = (lane_ch == col_ch).astype(jnp.float32)            # (WC, C)
    row_ch = jax.lax.broadcasted_iota(jnp.int32, (C, WC), 0)
    lane_ch2 = jax.lax.broadcasted_iota(jnp.int32, (C, WC), 1) % C
    scatter_c = (row_ch == lane_ch2).astype(jnp.float32)          # (C, WC)

    ch_sum = jnp.dot(jnp.sum(acc, axis=0, keepdims=True), gather_c,
                     preferred_element_type=jnp.float32)          # (1, C)
    mean_row = jnp.dot(ch_sum * inv_n, scatter_c,
                       preferred_element_type=jnp.float32)        # (1, WC)
    centered = acc - mean_row
    ch_var = jnp.dot(jnp.sum(centered * centered, axis=0, keepdims=True),
                     gather_c, preferred_element_type=jnp.float32) * inv_n
    inv_std_row = jnp.dot(jax.lax.rsqrt(ch_var + _EPS), scatter_c,
                          preferred_element_type=jnp.float32)     # (1, WC)

    y = centered * (inv_std_row * gb_ref[pl.ds(0, 1), :]) + gb_ref[pl.ds(1, 1), :]
    return jnp.maximum(y, 0.0)


def _double_conv_in_kernel(x_ref, w1_ref, w2_ref, gb1_ref, gb2_ref, o_ref,
                           xpad1, xpad2, *, H, W, Cmid, Cout):
    """One batch element: (conv3x3 + IN + ReLU) x 2, fully in VMEM."""
    # Stage 1: zero-pad the H border in VMEM (no HBM pad copy).
    zrow1 = jnp.zeros((1, xpad1.shape[1]), xpad1.dtype)
    xpad1[pl.ds(0, 1), :] = zrow1
    xpad1[pl.ds(H + 1, 1), :] = zrow1
    xpad1[pl.ds(1, H), :] = x_ref[0].astype(xpad1.dtype)
    y1 = _conv3x3_in_relu(xpad1, w1_ref, gb1_ref, H=H, W=W, C=Cmid)

    # Stage 2: intermediate never leaves VMEM.
    zrow2 = jnp.zeros((1, xpad2.shape[1]), xpad2.dtype)
    xpad2[pl.ds(0, 1), :] = zrow2
    xpad2[pl.ds(H + 1, 1), :] = zrow2
    xpad2[pl.ds(1, H), :] = y1
    y2 = _conv3x3_in_relu(xpad2, w2_ref, gb2_ref, H=H, W=W, C=Cout)

    o_ref[0] = y2.astype(o_ref.dtype)  # lane-dense (H, W*Cout) store


def _banded_conv_weight(w_oihw, width):
    """OIHW (Cout, Cin, 3, 3) -> banded weight (3, W*Cin, W*Cout).

    big[ky, a*Cin+ci, w*Cout+co] = w[co, ci, ky, a-w+1] if 0 <= a-w+1 < 3 else 0,
    so the width taps and the W-boundary zero padding are folded into the
    contraction; only the H border needs physical zero rows.
    """
    cout, cin = w_oihw.shape[0], w_oihw.shape[1]
    taps = jnp.transpose(w_oihw, (2, 3, 1, 0)).astype(jnp.float32)  # (ky,kx,ci,co)
    a = jnp.arange(width)
    w = jnp.arange(width)
    dx = jnp.arange(3)
    sel = (a[None, :, None] == (w[None, None, :] + dx[:, None, None] - 1))
    sel = sel.astype(jnp.float32)                                   # (3, Win, Wout)
    big = jnp.einsum('xaw,yxio->yaiwo', sel, taps)                  # (3,W,ci,W,co)
    return big.reshape(3, width * cin, width * cout)


@jax.jit
def double_conv_in(x_nchw, params):
    """Forward pass of DoubleConvIN.  x_nchw: (N, C_in, H, W) float32."""
    N, Cin, H, W = x_nchw.shape
    Cmid = params["w1"].shape[0]
    Cout = params["w2"].shape[0]

    # NCHW -> lane-packed (N, H, W*Cin), bf16 activations for the MXU path.
    x = jnp.transpose(x_nchw, (0, 2, 3, 1)).reshape(N, H, W * Cin)
    x = x.astype(jnp.bfloat16)

    w1 = _banded_conv_weight(params["w1"], W).astype(jnp.bfloat16)  # (3,W*Cin, W*Cmid)
    w2 = _banded_conv_weight(params["w2"], W).astype(jnp.bfloat16)  # (3,W*Cmid,W*Cout)
    gb1 = jnp.stack([jnp.tile(params["g1"], W),
                     jnp.tile(params["b1"], W)]).astype(jnp.float32)  # (2, W*Cmid)
    gb2 = jnp.stack([jnp.tile(params["g2"], W),
                     jnp.tile(params["b2"], W)]).astype(jnp.float32)  # (2, W*Cout)

    kernel = functools.partial(_double_conv_in_kernel,
                               H=H, W=W, Cmid=Cmid, Cout=Cout)

    out = pl.pallas_call(
        kernel,
        out_shape=jax.ShapeDtypeStruct((N, H, W * Cout), jnp.float32),
        grid_spec=pltpu.PrefetchScalarGridSpec(
            num_scalar_prefetch=0,
            grid=(N,),
            in_specs=[
                pl.BlockSpec((1, H, W * Cin), lambda n: (n, 0, 0)),
                pl.BlockSpec((3, W * Cin, W * Cmid), lambda n: (0, 0, 0)),
                pl.BlockSpec((3, W * Cmid, W * Cout), lambda n: (0, 0, 0)),
                pl.BlockSpec((2, W * Cmid), lambda n: (0, 0)),
                pl.BlockSpec((2, W * Cout), lambda n: (0, 0)),
            ],
            out_specs=pl.BlockSpec((1, H, W * Cout), lambda n: (n, 0, 0)),
            scratch_shapes=[
                pltpu.VMEM((H + 2, W * Cin), jnp.float32),
                pltpu.VMEM((H + 2, W * Cmid), jnp.float32),
            ],
        ),
        compiler_params=pltpu.CompilerParams(
            dimension_semantics=("parallel",),
        ),
    )(x, w1, w2, gb1, gb2)

    return jnp.transpose(out.reshape(N, H, W, Cout), (0, 3, 1, 2))


def init_params(key, in_channels, out_channels, mid_channels=None):
    if not mid_channels:
        mid_channels = out_channels
    ks = jax.random.split(key, 6)

    def conv_w(k, cin, cout):
        bound = 1.0 / np.sqrt(cin * 9)
        return jax.random.uniform(k, (cout, cin, 3, 3), jnp.float32, -bound, bound)

    return {
        "w1": conv_w(ks[0], in_channels, mid_channels),
        "g1": 1.0 + 0.1 * jax.random.normal(ks[1], (mid_channels,), jnp.float32),
        "b1": 0.1 * jax.random.normal(ks[2], (mid_channels,), jnp.float32),
        "w2": conv_w(ks[3], mid_channels, out_channels),
        "g2": 1.0 + 0.1 * jax.random.normal(ks[4], (out_channels,), jnp.float32),
        "b2": 0.1 * jax.random.normal(ks[5], (out_channels,), jnp.float32),
    }


def _reference(x_nchw, params):
    """Pure-JAX reference, quantizing MXU inputs to bf16 like the kernel."""

    def q(a):
        return a.astype(jnp.bfloat16).astype(jnp.float32)

    def stage(x, w_oihw, gamma, beta):
        y = jax.lax.conv_general_dilated(
            q(x), q(w_oihw), window_strides=(1, 1), padding=((1, 1), (1, 1)),
            dimension_numbers=("NCHW", "OIHW", "NCHW"),
            precision=jax.lax.Precision.HIGHEST)
        mean = jnp.mean(y, axis=(2, 3), keepdims=True)
        var = jnp.mean((y - mean) ** 2, axis=(2, 3), keepdims=True)
        y = (y - mean) * jax.lax.rsqrt(var + _EPS)
        y = y * gamma[None, :, None, None] + beta[None, :, None, None]
        return jnp.maximum(y, 0.0)

    x = stage(x_nchw, params["w1"], params["g1"], params["b1"])
    return stage(x, params["w2"], params["g2"], params["b2"])


if __name__ == "__main__":
    key = jax.random.PRNGKey(0)
    k_x, k_p = jax.random.split(key)

    N, C_IN, C_OUT, H, W = 2, 4, 8, 16, 16
    x = jax.random.normal(k_x, (N, C_IN, H, W), jnp.float32)
    params = init_params(k_p, C_IN, C_OUT)

    out = jax.block_until_ready(double_conv_in(x, params))
    ref = jax.block_until_ready(_reference(x, params))

    assert out.shape == (N, C_OUT, H, W), out.shape
    np.testing.assert_allclose(np.asarray(out), np.asarray(ref),
                               rtol=2e-2, atol=2e-2)
    print("KERNEL_OK")
</pallas_src>

<mosaic_0001>
module attributes {stable_mosaic.version = 11 : i64} {
  func.func @_double_conv_in_kernel(%arg0: i32, %arg1: memref<1x16x64xbf16, #tpu.memory_space<vmem>>, %arg2: memref<3x64x128xbf16, #tpu.memory_space<vmem>>, %arg3: memref<3x128x128xbf16, #tpu.memory_space<vmem>>, %arg4: memref<2x128xf32, #tpu.memory_space<vmem>>, %arg5: memref<2x128xf32, #tpu.memory_space<vmem>>, %arg6: memref<1x16x128xf32, #tpu.memory_space<vmem>>, %arg7: memref<18x64xf32, #tpu.memory_space<vmem>>, %arg8: memref<18x128xf32, #tpu.memory_space<vmem>>) attributes {dimension_semantics = [#tpu.dimension_semantics<parallel>], iteration_bounds = array<i64: 2>, scalar_prefetch = 0 : i64, scratch_operands = 2 : i64, tpu.core_type = #tpu.core_type<tc>, window_params = [{transform_indices = @transform_0, window_bounds = array<i64: 1, 16, 64>}, {pipeline_mode = #tpu.pipeline_mode<synchronous>, transform_indices = @transform_1, window_bounds = array<i64: 3, 64, 128>}, {pipeline_mode = #tpu.pipeline_mode<synchronous>, transform_indices = @transform_2, window_bounds = array<i64: 3, 128, 128>}, {pipeline_mode = #tpu.pipeline_mode<synchronous>, transform_indices = @transform_3, window_bounds = array<i64: 2, 128>}, {pipeline_mode = #tpu.pipeline_mode<synchronous>, transform_indices = @transform_4, window_bounds = array<i64: 2, 128>}, {transform_indices = @transform_5, window_bounds = array<i64: 1, 16, 128>}]} {
    %cst = arith.constant 0.000000e+00 : f32
    %0 = vector.broadcast %cst : f32 to vector<1x64xf32>
    %c0 = arith.constant 0 : index
    %c0_0 = arith.constant 0 : index
    %1 = vector.load %arg7[%c0, %c0_0] : memref<18x64xf32, #tpu.memory_space<vmem>>, vector<1x64xf32>
    tpu.vector_store %arg7[%c0, %c0_0], %0 {strides = array<i32>} : memref<18x64xf32, #tpu.memory_space<vmem>>, vector<1x64xf32>,
    %c17 = arith.constant 17 : index
    %c0_1 = arith.constant 0 : index
    %2 = vector.load %arg7[%c17, %c0_1] : memref<18x64xf32, #tpu.memory_space<vmem>>, vector<1x64xf32>
    tpu.vector_store %arg7[%c17, %c0_1], %0 {strides = array<i32>} : memref<18x64xf32, #tpu.memory_space<vmem>>, vector<1x64xf32>,
    %c0_2 = arith.constant 0 : index
    %c0_3 = arith.constant 0 : index
    %c0_4 = arith.constant 0 : index
    %3 = vector.load %arg1[%c0_2, %c0_3, %c0_4] : memref<1x16x64xbf16, #tpu.memory_space<vmem>>, vector<1x16x64xbf16>
    %4 = vector.shape_cast %3 : vector<1x16x64xbf16> to vector<16x64xbf16>
    %5 = arith.extf %4 : vector<16x64xbf16> to vector<16x64xf32>
    %c1 = arith.constant 1 : index
    %c0_5 = arith.constant 0 : index
    %6 = vector.load %arg7[%c1, %c0_5] : memref<18x64xf32, #tpu.memory_space<vmem>>, vector<16x64xf32>
    tpu.vector_store %arg7[%c1, %c0_5], %5 {strides = array<i32>} : memref<18x64xf32, #tpu.memory_space<vmem>>, vector<16x64xf32>,
    %cst_6 = arith.constant 0.000000e+00 : f32
    %7 = vector.broadcast %cst_6 : f32 to vector<16x128xf32>
    %c0_7 = arith.constant 0 : index
    %c0_8 = arith.constant 0 : index
    %8 = vector.load %arg7[%c0_7, %c0_8] : memref<18x64xf32, #tpu.memory_space<vmem>>, vector<16x64xf32>
    %9 = arith.truncf %8 : vector<16x64xf32> to vector<16x64xbf16>
    %c0_9 = arith.constant 0 : index
    %c0_10 = arith.constant 0 : index
    %c0_11 = arith.constant 0 : index
    %10 = vector.load %arg2[%c0_9, %c0_10, %c0_11] : memref<3x64x128xbf16, #tpu.memory_space<vmem>>, vector<1x64x128xbf16>
    %11 = vector.shape_cast %10 : vector<1x64x128xbf16> to vector<64x128xbf16>
    %cst_12 = arith.constant dense<0.000000e+00> : vector<16x128xf32>
    %12 = tpu.matmul %9, %11, %cst_12 {dimension_numbers = #tpu.dot_dimension_numbers<[1], [0], [0], [1], [0, 0, 1, 1], [], []>} : vector<16x64xbf16>, vector<64x128xbf16>, vector<16x128xf32> -> vector<16x128xf32>
    %13 = arith.addf %7, %12 : vector<16x128xf32>
    %c1_13 = arith.constant 1 : index
    %c0_14 = arith.constant 0 : index
    %14 = vector.load %arg7[%c1_13, %c0_14] : memref<18x64xf32, #tpu.memory_space<vmem>>, vector<16x64xf32>
    %15 = arith.truncf %14 : vector<16x64xf32> to vector<16x64xbf16>
    %c1_15 = arith.constant 1 : index
    %c0_16 = arith.constant 0 : index
    %c0_17 = arith.constant 0 : index
    %16 = vector.load %arg2[%c1_15, %c0_16, %c0_17] : memref<3x64x128xbf16, #tpu.memory_space<vmem>>, vector<1x64x128xbf16>
    %17 = vector.shape_cast %16 : vector<1x64x128xbf16> to vector<64x128xbf16>
    %cst_18 = arith.constant dense<0.000000e+00> : vector<16x128xf32>
    %18 = tpu.matmul %15, %17, %cst_18 {dimension_numbers = #tpu.dot_dimension_numbers<[1], [0], [0], [1], [0, 0, 1, 1], [], []>} : vector<16x64xbf16>, vector<64x128xbf16>, vector<16x128xf32> -> vector<16x128xf32>
    %19 = arith.addf %13, %18 : vector<16x128xf32>
    %c2 = arith.constant 2 : index
    %c0_19 = arith.constant 0 : index
    %20 = vector.load %arg7[%c2, %c0_19] : memref<18x64xf32, #tpu.memory_space<vmem>>, vector<16x64xf32>
    %21 = arith.truncf %20 : vector<16x64xf32> to vector<16x64xbf16>
    %c2_20 = arith.constant 2 : index
    %c0_21 = arith.constant 0 : index
    %c0_22 = arith.constant 0 : index
    %22 = vector.load %arg2[%c2_20, %c0_21, %c0_22] : memref<3x64x128xbf16, #tpu.memory_space<vmem>>, vector<1x64x128xbf16>
    %23 = vector.shape_cast %22 : vector<1x64x128xbf16> to vector<64x128xbf16>
    %cst_23 = arith.constant dense<0.000000e+00> : vector<16x128xf32>
    %24 = tpu.matmul %21, %23, %cst_23 {dimension_numbers = #tpu.dot_dimension_numbers<[1], [0], [0], [1], [0, 0, 1, 1], [], []>} : vector<16x64xbf16>, vector<64x128xbf16>, vector<16x128xf32> -> vector<16x128xf32>
    %25 = arith.addf %19, %24 : vector<16x128xf32>
    %26 = tpu.iota {dimensions = array<i32: 0>} : vector<128x8xi32>
    %c8_i32 = arith.constant 8 : i32
    %c0_i32 = arith.constant 0 : i32
    %27 = arith.cmpi eq, %c8_i32, %c0_i32 : i32
    %c1_i32 = arith.constant 1 : i32
    %28 = arith.select %27, %c1_i32, %c8_i32 : i32
    %29 = vector.broadcast %28 : i32 to vector<128x8xi32>
    %30 = arith.remsi %26, %29 : vector<128x8xi32>
    %c0_i32_24 = arith.constant 0 : i32
    %31 = vector.broadcast %c0_i32_24 : i32 to vector<128x8xi32>
    %32 = arith.cmpi ne, %30, %31 : vector<128x8xi32>
    %c0_i32_25 = arith.constant 0 : i32
    %33 = vector.broadcast %c0_i32_25 : i32 to vector<128x8xi32>
    %34 = arith.cmpi slt, %30, %33 : vector<128x8xi32>
    %c0_i32_26 = arith.constant 0 : i32
    %35 = arith.cmpi slt, %28, %c0_i32_26 : i32
    %36 = vector.broadcast %35 : i1 to vector<128x8xi1>
    %37 = vector.broadcast %36 : vector<128x8xi1> to vector<128x8xi1>
    %38 = arith.xori %34, %37 : vector<128x8xi1>
    %39 = arith.andi %38, %32 : vector<128x8xi1>
    %40 = vector.broadcast %28 : i32 to vector<128x8xi32>
    %41 = arith.addi %30, %40 : vector<128x8xi32>
    %42 = arith.select %39, %41, %30 : vector<128x8xi1>, vector<128x8xi32>
    %43 = tpu.iota {dimensions = array<i32: 1>} : vector<128x8xi32>
    %44 = arith.cmpi eq, %42, %43 : vector<128x8xi32>
    %45 = arith.extui %44 : vector<128x8xi1> to vector<128x8xi32>
    %46 = arith.sitofp %45 : vector<128x8xi32> to vector<128x8xf32>
    %47 = tpu.iota {dimensions = array<i32: 0>} : vector<8x128xi32>
    %48 = tpu.iota {dimensions = array<i32: 1>} : vector<8x128xi32>
    %c8_i32_27 = arith.constant 8 : i32
    %c0_i32_28 = arith.constant 0 : i32
    %49 = arith.cmpi eq, %c8_i32_27, %c0_i32_28 : i32
    %c1_i32_29 = arith.constant 1 : i32
    %50 = arith.select %49, %c1_i32_29, %c8_i32_27 : i32
    %51 = vector.broadcast %50 : i32 to vector<8x128xi32>
    %52 = arith.remsi %48, %51 : vector<8x128xi32>
    %c0_i32_30 = arith.constant 0 : i32
    %53 = vector.broadcast %c0_i32_30 : i32 to vector<8x128xi32>
    %54 = arith.cmpi ne, %52, %53 : vector<8x128xi32>
    %c0_i32_31 = arith.constant 0 : i32
    %55 = vector.broadcast %c0_i32_31 : i32 to vector<8x128xi32>
    %56 = arith.cmpi slt, %52, %55 : vector<8x128xi32>
    %c0_i32_32 = arith.constant 0 : i32
    %57 = arith.cmpi slt, %50, %c0_i32_32 : i32
    %58 = vector.broadcast %57 : i1 to vector<8x128xi1>
    %59 = vector.broadcast %58 : vector<8x128xi1> to vector<8x128xi1>
    %60 = arith.xori %56, %59 : vector<8x128xi1>
    %61 = arith.andi %60, %54 : vector<8x128xi1>
    %62 = vector.broadcast %50 : i32 to vector<8x128xi32>
    %63 = arith.addi %52, %62 : vector<8x128xi32>
    %64 = arith.select %61, %63, %52 : vector<8x128xi1>, vector<8x128xi32>
    %65 = arith.cmpi eq, %47, %64 : vector<8x128xi32>
    %66 = arith.extui %65 : vector<8x128xi1> to vector<8x128xi32>
    %67 = arith.sitofp %66 : vector<8x128xi32> to vector<8x128xf32>
    %cst_33 = arith.constant dense<0.000000e+00> : vector<128xf32>
    %68 = vector.multi_reduction <add>, %25, %cst_33 [0] : vector<16x128xf32> to vector<128xf32>
    %69 = vector.shape_cast %68 : vector<128xf32> to vector<1x128xf32>
    %cst_34 = arith.constant dense<0.000000e+00> : vector<1x8xf32>
    %70 = tpu.matmul %69, %46, %cst_34 {dimension_numbers = #tpu.dot_dimension_numbers<[1], [0], [0], [1], [0, 0, 1, 1], [], []>} : vector<1x128xf32>, vector<128x8xf32>, vector<1x8xf32> -> vector<1x8xf32>
    %cst_35 = arith.constant 3.906250e-03 : f32
    %71 = vector.broadcast %cst_35 : f32 to vector<1x8xf32>
    %72 = arith.mulf %70, %71 : vector<1x8xf32>
    %cst_36 = arith.constant dense<0.000000e+00> : vector<1x128xf32>
    %73 = tpu.matmul %72, %67, %cst_36 {dimension_numbers = #tpu.dot_dimension_numbers<[1], [0], [0], [1], [0, 0, 1, 1], [], []>} : vector<1x8xf32>, vector<8x128xf32>, vector<1x128xf32> -> vector<1x128xf32>
    %74 = vector.broadcast %73 : vector<1x128xf32> to vector<16x128xf32>
    %75 = arith.subf %25, %74 : vector<16x128xf32>
    %76 = arith.mulf %75, %75 : vector<16x128xf32>
    %cst_37 = arith.constant dense<0.000000e+00> : vector<128xf32>
    %77 = vector.multi_reduction <add>, %76, %cst_37 [0] : vector<16x128xf32> to vector<128xf32>
    %78 = vector.shape_cast %77 : vector<128xf32> to vector<1x128xf32>
    %cst_38 = arith.constant dense<0.000000e+00> : vector<1x8xf32>
    %79 = tpu.matmul %78, %46, %cst_38 {dimension_numbers = #tpu.dot_dimension_numbers<[1], [0], [0], [1], [0, 0, 1, 1], [], []>} : vector<1x128xf32>, vector<128x8xf32>, vector<1x8xf32> -> vector<1x8xf32>
    %cst_39 = arith.constant 3.906250e-03 : f32
    %80 = vector.broadcast %cst_39 : f32 to vector<1x8xf32>
    %81 = arith.mulf %79, %80 : vector<1x8xf32>
    %cst_40 = arith.constant 9.99999974E-6 : f32
    %82 = vector.broadcast %cst_40 : f32 to vector<1x8xf32>
    %83 = arith.addf %81, %82 : vector<1x8xf32>
    %84 = math.rsqrt %83 : vector<1x8xf32>
    %cst_41 = arith.constant dense<0.000000e+00> : vector<1x128xf32>
    %85 = tpu.matmul %84, %67, %cst_41 {dimension_numbers = #tpu.dot_dimension_numbers<[1], [0], [0], [1], [0, 0, 1, 1], [], []>} : vector<1x8xf32>, vector<8x128xf32>, vector<1x128xf32> -> vector<1x128xf32>
    %c0_42 = arith.constant 0 : index
    %c0_43 = arith.constant 0 : index
    %86 = vector.load %arg4[%c0_42, %c0_43] : memref<2x128xf32, #tpu.memory_space<vmem>>, vector<1x128xf32>
    %87 = arith.mulf %85, %86 : vector<1x128xf32>
    %88 = vector.broadcast %87 : vector<1x128xf32> to vector<16x128xf32>
    %89 = arith.mulf %75, %88 : vector<16x128xf32>
    %c1_44 = arith.constant 1 : index
    %c0_45 = arith.constant 0 : index
    %90 = vector.load %arg4[%c1_44, %c0_45] : memref<2x128xf32, #tpu.memory_space<vmem>>, vector<1x128xf32>
    %91 = vector.broadcast %90 : vector<1x128xf32> to vector<16x128xf32>
    %92 = arith.addf %89, %91 : vector<16x128xf32>
    %cst_46 = arith.constant 0.000000e+00 : f32
    %93 = vector.broadcast %cst_46 : f32 to vector<16x128xf32>
    %94 = arith.maximumf %92, %93 : vector<16x128xf32>
    %cst_47 = arith.constant 0.000000e+00 : f32
    %95 = vector.broadcast %cst_47 : f32 to vector<1x128xf32>
    %c0_48 = arith.constant 0 : index
    %c0_49 = arith.constant 0 : index
    %96 = vector.load %arg8[%c0_48, %c0_49] : memref<18x128xf32, #tpu.memory_space<vmem>>, vector<1x128xf32>
    tpu.vector_store %arg8[%c0_48, %c0_49], %95 {strides = array<i32>} : memref<18x128xf32, #tpu.memory_space<vmem>>, vector<1x128xf32>,
    %c17_50 = arith.constant 17 : index
    %c0_51 = arith.constant 0 : index
    %97 = vector.load %arg8[%c17_50, %c0_51] : memref<18x128xf32, #tpu.memory_space<vmem>>, vector<1x128xf32>
    tpu.vector_store %arg8[%c17_50, %c0_51], %95 {strides = array<i32>} : memref<18x128xf32, #tpu.memory_space<vmem>>, vector<1x128xf32>,
    %c1_52 = arith.constant 1 : index
    %c0_53 = arith.constant 0 : index
    %98 = vector.load %arg8[%c1_52, %c0_53] : memref<18x128xf32, #tpu.memory_space<vmem>>, vector<16x128xf32>
    tpu.vector_store %arg8[%c1_52, %c0_53], %94 {strides = array<i32>} : memref<18x128xf32, #tpu.memory_space<vmem>>, vector<16x128xf32>,
    %cst_54 = arith.constant 0.000000e+00 : f32
    %99 = vector.broadcast %cst_54 : f32 to vector<16x128xf32>
    %c0_55 = arith.constant 0 : index
    %c0_56 = arith.constant 0 : index
    %100 = vector.load %arg8[%c0_55, %c0_56] : memref<18x128xf32, #tpu.memory_space<vmem>>, vector<16x128xf32>
    %101 = arith.truncf %100 : vector<16x128xf32> to vector<16x128xbf16>
    %c0_57 = arith.constant 0 : index
    %c0_58 = arith.constant 0 : index
    %c0_59 = arith.constant 0 : index
    %102 = vector.load %arg3[%c0_57, %c0_58, %c0_59] : memref<3x128x128xbf16, #tpu.memory_space<vmem>>, vector<1x128x128xbf16>
    %103 = vector.shape_cast %102 : vector<1x128x128xbf16> to vector<128x128xbf16>
    %cst_60 = arith.constant dense<0.000000e+00> : vector<16x128xf32>
    %104 = tpu.matmul %101, %103, %cst_60 {dimension_numbers = #tpu.dot_dimension_numbers<[1], [0], [0], [1], [0, 0, 1, 1], [], []>} : vector<16x128xbf16>, vector<128x128xbf16>, vector<16x128xf32> -> vector<16x128xf32>
    %105 = arith.addf %99, %104 : vector<16x128xf32>
    %c1_61 = arith.constant 1 : index
    %c0_62 = arith.constant 0 : index
    %106 = vector.load %arg8[%c1_61, %c0_62] : memref<18x128xf32, #tpu.memory_space<vmem>>, vector<16x128xf32>
    %107 = arith.truncf %106 : vector<16x128xf32> to vector<16x128xbf16>
    %c1_63 = arith.constant 1 : index
    %c0_64 = arith.constant 0 : index
    %c0_65 = arith.constant 0 : index
    %108 = vector.load %arg3[%c1_63, %c0_64, %c0_65] : memref<3x128x128xbf16, #tpu.memory_space<vmem>>, vector<1x128x128xbf16>
    %109 = vector.shape_cast %108 : vector<1x128x128xbf16> to vector<128x128xbf16>
    %cst_66 = arith.constant dense<0.000000e+00> : vector<16x128xf32>
    %110 = tpu.matmul %107, %109, %cst_66 {dimension_numbers = #tpu.dot_dimension_numbers<[1], [0], [0], [1], [0, 0, 1, 1], [], []>} : vector<16x128xbf16>, vector<128x128xbf16>, vector<16x128xf32> -> vector<16x128xf32>
    %111 = arith.addf %105, %110 : vector<16x128xf32>
    %c2_67 = arith.constant 2 : index
    %c0_68 = arith.constant 0 : index
    %112 = vector.load %arg8[%c2_67, %c0_68] : memref<18x128xf32, #tpu.memory_space<vmem>>, vector<16x128xf32>
    %113 = arith.truncf %112 : vector<16x128xf32> to vector<16x128xbf16>
    %c2_69 = arith.constant 2 : index
    %c0_70 = arith.constant 0 : index
    %c0_71 = arith.constant 0 : index
    %114 = vector.load %arg3[%c2_69, %c0_70, %c0_71] : memref<3x128x128xbf16, #tpu.memory_space<vmem>>, vector<1x128x128xbf16>
    %115 = vector.shape_cast %114 : vector<1x128x128xbf16> to vector<128x128xbf16>
    %cst_72 = arith.constant dense<0.000000e+00> : vector<16x128xf32>
    %116 = tpu.matmul %113, %115, %cst_72 {dimension_numbers = #tpu.dot_dimension_numbers<[1], [0], [0], [1], [0, 0, 1, 1], [], []>} : vector<16x128xbf16>, vector<128x128xbf16>, vector<16x128xf32> -> vector<16x128xf32>
    %117 = arith.addf %111, %116 : vector<16x128xf32>
    %118 = tpu.iota {dimensions = array<i32: 0>} : vector<128x8xi32>
    %c8_i32_73 = arith.constant 8 : i32
    %c0_i32_74 = arith.constant 0 : i32
    %119 = arith.cmpi eq, %c8_i32_73, %c0_i32_74 : i32
    %c1_i32_75 = arith.constant 1 : i32
    %120 = arith.select %119, %c1_i32_75, %c8_i32_73 : i32
    %121 = vector.broadcast %120 : i32 to vector<128x8xi32>
    %122 = arith.remsi %118, %121 : vector<128x8xi32>
    %c0_i32_76 = arith.constant 0 : i32
    %123 = vector.broadcast %c0_i32_76 : i32 to vector<128x8xi32>
    %124 = arith.cmpi ne, %122, %123 : vector<128x8xi32>
    %c0_i32_77 = arith.constant 0 : i32
    %125 = vector.broadcast %c0_i32_77 : i32 to vector<128x8xi32>
    %126 = arith.cmpi slt, %122, %125 : vector<128x8xi32>
    %c0_i32_78 = arith.constant 0 : i32
    %127 = arith.cmpi slt, %120, %c0_i32_78 : i32
    %128 = vector.broadcast %127 : i1 to vector<128x8xi1>
    %129 = vector.broadcast %128 : vector<128x8xi1> to vector<128x8xi1>
    %130 = arith.xori %126, %129 : vector<128x8xi1>
    %131 = arith.andi %130, %124 : vector<128x8xi1>
    %132 = vector.broadcast %120 : i32 to vector<128x8xi32>
    %133 = arith.addi %122, %132 : vector<128x8xi32>
    %134 = arith.select %131, %133, %122 : vector<128x8xi1>, vector<128x8xi32>
    %135 = tpu.iota {dimensions = array<i32: 1>} : vector<128x8xi32>
    %136 = arith.cmpi eq, %134, %135 : vector<128x8xi32>
    %137 = arith.extui %136 : vector<128x8xi1> to vector<128x8xi32>
    %138 = arith.sitofp %137 : vector<128x8xi32> to vector<128x8xf32>
    %139 = tpu.iota {dimensions = array<i32: 0>} : vector<8x128xi32>
    %140 = tpu.iota {dimensions = array<i32: 1>} : vector<8x128xi32>
    %c8_i32_79 = arith.constant 8 : i32
    %c0_i32_80 = arith.constant 0 : i32
    %141 = arith.cmpi eq, %c8_i32_79, %c0_i32_80 : i32
    %c1_i32_81 = arith.constant 1 : i32
    %142 = arith.select %141, %c1_i32_81, %c8_i32_79 : i32
    %143 = vector.broadcast %142 : i32 to vector<8x128xi32>
    %144 = arith.remsi %140, %143 : vector<8x128xi32>
    %c0_i32_82 = arith.constant 0 : i32
    %145 = vector.broadcast %c0_i32_82 : i32 to vector<8x128xi32>
    %146 = arith.cmpi ne, %144, %145 : vector<8x128xi32>
    %c0_i32_83 = arith.constant 0 : i32
    %147 = vector.broadcast %c0_i32_83 : i32 to vector<8x128xi32>
    %148 = arith.cmpi slt, %144, %147 : vector<8x128xi32>
    %c0_i32_84 = arith.constant 0 : i32
    %149 = arith.cmpi slt, %142, %c0_i32_84 : i32
    %150 = vector.broadcast %149 : i1 to vector<8x128xi1>
    %151 = vector.broadcast %150 : vector<8x128xi1> to vector<8x128xi1>
    %152 = arith.xori %148, %151 : vector<8x128xi1>
    %153 = arith.andi %152, %146 : vector<8x128xi1>
    %154 = vector.broadcast %142 : i32 to vector<8x128xi32>
    %155 = arith.addi %144, %154 : vector<8x128xi32>
    %156 = arith.select %153, %155, %144 : vector<8x128xi1>, vector<8x128xi32>
    %157 = arith.cmpi eq, %139, %156 : vector<8x128xi32>
    %158 = arith.extui %157 : vector<8x128xi1> to vector<8x128xi32>
    %159 = arith.sitofp %158 : vector<8x128xi32> to vector<8x128xf32>
    %cst_85 = arith.constant dense<0.000000e+00> : vector<128xf32>
    %160 = vector.multi_reduction <add>, %117, %cst_85 [0] : vector<16x128xf32> to vector<128xf32>
    %161 = vector.shape_cast %160 : vector<128xf32> to vector<1x128xf32>
    %cst_86 = arith.constant dense<0.000000e+00> : vector<1x8xf32>
    %162 = tpu.matmul %161, %138, %cst_86 {dimension_numbers = #tpu.dot_dimension_numbers<[1], [0], [0], [1], [0, 0, 1, 1], [], []>} : vector<1x128xf32>, vector<128x8xf32>, vector<1x8xf32> -> vector<1x8xf32>
    %cst_87 = arith.constant 3.906250e-03 : f32
    %163 = vector.broadcast %cst_87 : f32 to vector<1x8xf32>
    %164 = arith.mulf %162, %163 : vector<1x8xf32>
    %cst_88 = arith.constant dense<0.000000e+00> : vector<1x128xf32>
    %165 = tpu.matmul %164, %159, %cst_88 {dimension_numbers = #tpu.dot_dimension_numbers<[1], [0], [0], [1], [0, 0, 1, 1], [], []>} : vector<1x8xf32>, vector<8x128xf32>, vector<1x128xf32> -> vector<1x128xf32>
    %166 = vector.broadcast %165 : vector<1x128xf32> to vector<16x128xf32>
    %167 = arith.subf %117, %166 : vector<16x128xf32>
    %168 = arith.mulf %167, %167 : vector<16x128xf32>
    %cst_89 = arith.constant dense<0.000000e+00> : vector<128xf32>
    %169 = vector.multi_reduction <add>, %168, %cst_89 [0] : vector<16x128xf32> to vector<128xf32>
    %170 = vector.shape_cast %169 : vector<128xf32> to vector<1x128xf32>
    %cst_90 = arith.constant dense<0.000000e+00> : vector<1x8xf32>
    %171 = tpu.matmul %170, %138, %cst_90 {dimension_numbers = #tpu.dot_dimension_numbers<[1], [0], [0], [1], [0, 0, 1, 1], [], []>} : vector<1x128xf32>, vector<128x8xf32>, vector<1x8xf32> -> vector<1x8xf32>
    %cst_91 = arith.constant 3.906250e-03 : f32
    %172 = vector.broadcast %cst_91 : f32 to vector<1x8xf32>
    %173 = arith.mulf %171, %172 : vector<1x8xf32>
    %cst_92 = arith.constant 9.99999974E-6 : f32
    %174 = vector.broadcast %cst_92 : f32 to vector<1x8xf32>
    %175 = arith.addf %173, %174 : vector<1x8xf32>
    %176 = math.rsqrt %175 : vector<1x8xf32>
    %cst_93 = arith.constant dense<0.000000e+00> : vector<1x128xf32>
    %177 = tpu.matmul %176, %159, %cst_93 {dimension_numbers = #tpu.dot_dimension_numbers<[1], [0], [0], [1], [0, 0, 1, 1], [], []>} : vector<1x8xf32>, vector<8x128xf32>, vector<1x128xf32> -> vector<1x128xf32>
    %c0_94 = arith.constant 0 : index
    %c0_95 = arith.constant 0 : index
    %178 = vector.load %arg5[%c0_94, %c0_95] : memref<2x128xf32, #tpu.memory_space<vmem>>, vector<1x128xf32>
    %179 = arith.mulf %177, %178 : vector<1x128xf32>
    %180 = vector.broadcast %179 : vector<1x128xf32> to vector<16x128xf32>
    %181 = arith.mulf %167, %180 : vector<16x128xf32>
    %c1_96 = arith.constant 1 : index
    %c0_97 = arith.constant 0 : index
    %182 = vector.load %arg5[%c1_96, %c0_97] : memref<2x128xf32, #tpu.memory_space<vmem>>, vector<1x128xf32>
    %183 = vector.broadcast %182 : vector<1x128xf32> to vector<16x128xf32>
    %184 = arith.addf %181, %183 : vector<16x128xf32>
    %cst_98 = arith.constant 0.000000e+00 : f32
    %185 = vector.broadcast %cst_98 : f32 to vector<16x128xf32>
    %186 = arith.maximumf %184, %185 : vector<16x128xf32>
    %c0_99 = arith.constant 0 : index
    %c0_100 = arith.constant 0 : index
    %c0_101 = arith.constant 0 : index
    %187 = vector.load %arg6[%c0_99, %c0_100, %c0_101] : memref<1x16x128xf32, #tpu.memory_space<vmem>>, vector<1x16x128xf32>
    %188 = vector.shape_cast %187 : vector<1x16x128xf32> to vector<16x128xf32>
    %189 = vector.shape_cast %186 : vector<16x128xf32> to vector<1x16x128xf32>
    tpu.vector_store %arg6[%c0_99, %c0_100, %c0_101], %189 {strides = array<i32>} : memref<1x16x128xf32, #tpu.memory_space<vmem>>, vector<1x16x128xf32>,
    return
  }
  func.func @transform_0(%arg0: i32) -> (i32, i32, i32) {
    %c0_i32 = arith.constant 0 : i32
    %c0_i32_0 = arith.constant 0 : i32
    %c0_i32_1 = arith.constant 0 : i32
    return %arg0, %c0_i32, %c0_i32_0 : i32, i32, i32
  }
  func.func @transform_1(%arg0: i32) -> (i32, i32, i32) {
    %c0_i32 = arith.constant 0 : i32
    %c0_i32_0 = arith.constant 0 : i32
    %c0_i32_1 = arith.constant 0 : i32
    %c0_i32_2 = arith.constant 0 : i32
    return %c0_i32, %c0_i32_0, %c0_i32_1 : i32, i32, i32
  }
  func.func @transform_2(%arg0: i32) -> (i32, i32, i32) {
    %c0_i32 = arith.constant 0 : i32
    %c0_i32_0 = arith.constant 0 : i32
    %c0_i32_1 = arith.constant 0 : i32
    %c0_i32_2 = arith.constant 0 : i32
    return %c0_i32, %c0_i32_0, %c0_i32_1 : i32, i32, i32
  }
  func.func @transform_3(%arg0: i32) -> (i32, i32) {
    %c0_i32 = arith.constant 0 : i32
    %c0_i32_0 = arith.constant 0 : i32
    %c0_i32_1 = arith.constant 0 : i32
    return %c0_i32, %c0_i32_0 : i32, i32
  }
  func.func @transform_4(%arg0: i32) -> (i32, i32) {
    %c0_i32 = arith.constant 0 : i32
    %c0_i32_0 = arith.constant 0 : i32
    %c0_i32_1 = arith.constant 0 : i32
    return %c0_i32, %c0_i32_0 : i32, i32
  }
  func.func @transform_5(%arg0: i32) -> (i32, i32, i32) {
    %c0_i32 = arith.constant 0 : i32
    %c0_i32_0 = arith.constant 0 : i32
    %c0_i32_1 = arith.constant 0 : i32
    return %arg0, %c0_i32, %c0_i32_0 : i32, i32, i32
  }
}

</mosaic_0001>

<llo_original>
// kernel: tile.23
$region0: #{tile.23}
  #allocation0 [shape = 's32[1]{0}', space=sflag, size = 0x4, scoped, tag = 'scoped memory for tile.23']
  %s0 = inlined_call_operand.vmem [shape: f32[8], index: 0, kind: input, shape index: {}]
  %s1 = inlined_call_operand.vmem [shape: f32[16,8], index: 1, kind: output, shape index: {}]
  // Predicated region
  $region2: #{tile.23} parent=0 // pred_check
    _
  $region3: #{tile.23} parent=0 // pred_check_branch
    %3 = sbr.rel (0) target = $region5
  $region4: #{tile.23} parent=0 // pred_region
    _
  $region5: #{tile.23} parent=0 // pred_fallthru
    _
  %v4 = vld [vmem:[%s0] ss:$0 sm:$0xff]
  %5 = vst [vmem:[%s1] sm:$0xff] %v4
  %s6 = scalar_lea.vmem %s1, 8
  %7 = vst [vmem:[%s6] sm:$0xff] %v4

// kernel: tile.28
$region0: #{tile.28}
  %s0 = inlined_call_operand.vmem [shape: f32[16,8], index: 0, kind: input, shape index: {}]
  %s1 = inlined_call_operand.vmem [shape: f32[1,128], index: 1, kind: output, shape index: {}]
  $region1: #{tile.28} parent=0
    #allocation0 [shape = 'u8[4096]{0}', space=vmem, size = 0x1000, scoped, tag = 'scoped mem for output reshape']
    %v2 = vld [vmem:[%s0] sm:$0x1]
    %vm3 = vcmask 64512
    %4 = vst.msk [vmem:[#allocation0] sm:$0x1] %vm3, %v2
    %s5 = scalar_lea.vmem %s0, 15
    %v6 = vld [vmem:[%s5] sm:$0x1]
    %7 = vrot.lane.b32.xlu0 %v6, 120
    %v8 = vpop.permute.xlu0 %7
    %vm9 = vcmask 1048512
    %10 = vst.msk [vmem:[#allocation0] sm:$0x1] %vm9, %v8
    %s11 = scalar_lea.vmem %s0, 14
    %v12 = vld [vmem:[%s11] sm:$0x1]
    %13 = vrot.lane.b32.xlu0 %v12, 112
    %v14 = vpop.permute.xlu0 %13
    %vm15 = vcmask 982912
    %16 = vst.msk [vmem:[#allocation0] sm:$0x1] %vm15, %v14
    %s17 = scalar_lea.vmem %s0, 13
    %v18 = vld [vmem:[%s17] sm:$0x1]
    %19 = vrot.lane.b32.xlu0 %v18, 104
    %v20 = vpop.permute.xlu0 %19
    %vm21 = vcmask 917312
    %22 = vst.msk [vmem:[#allocation0] sm:$0x1] %vm21, %v20
    %s23 = scalar_lea.vmem %s0, 12
    %v24 = vld [vmem:[%s23] sm:$0x1]
    %25 = vrot.lane.b32.xlu0 %v24, 96
    %v26 = vpop.permute.xlu0 %25
    %vm27 = vcmask 851712
    %28 = vst.msk [vmem:[#allocation0] sm:$0x1] %vm27, %v26
    %s29 = scalar_lea.vmem %s0, 11
    %v30 = vld [vmem:[%s29] sm:$0x1]
    %31 = vrot.lane.b32.xlu0 %v30, 88
    %v32 = vpop.permute.xlu0 %31
    %vm33 = vcmask 786112
    %34 = vst.msk [vmem:[#allocation0] sm:$0x1] %vm33, %v32
    %s35 = scalar_lea.vmem %s0, 10
    %v36 = vld [vmem:[%s35] sm:$0x1]
    %37 = vrot.lane.b32.xlu0 %v36, 80
    %v38 = vpop.permute.xlu0 %37
    %vm39 = vcmask 720512
    %40 = vst.msk [vmem:[#allocation0] sm:$0x1] %vm39, %v38
    %s41 = scalar_lea.vmem %s0, 9
    %v42 = vld [vmem:[%s41] sm:$0x1]
    %43 = vrot.lane.b32.xlu0 %v42, 72
    %v44 = vpop.permute.xlu0 %43
    %vm45 = vcmask 654912
    %46 = vst.msk [vmem:[#allocation0] sm:$0x1] %vm45, %v44
    %s47 = scalar_lea.vmem %s0, 8
    %v48 = vld [vmem:[%s47] sm:$0x1]
    %49 = vrot.lane.b32.xlu0 %v48, 64
    %v50 = vpop.permute.xlu0 %49
    %vm51 = vcmask 589312
    %52 = vst.msk [vmem:[#allocation0] sm:$0x1] %vm51, %v50
    %s53 = scalar_lea.vmem %s0, 7
    %v54 = vld [vmem:[%s53] sm:$0x1]
    %55 = vrot.lane.b32.xlu0 %v54, 56
    %v56 = vpop.permute.xlu0 %55
    %vm57 = vcmask 523712
    %58 = vst.msk [vmem:[#allocation0] sm:$0x1] %vm57, %v56
    %s59 = scalar_lea.vmem %s0, 6
    %v60 = vld [vmem:[%s59] sm:$0x1]
    %61 = vrot.lane.b32.xlu0 %v60, 48
    %v62 = vpop.permute.xlu0 %61
    %vm63 = vcmask 458112
    %64 = vst.msk [vmem:[#allocation0] sm:$0x1] %vm63, %v62
    %s65 = scalar_lea.vmem %s0, 5
    %v66 = vld [vmem:[%s65] sm:$0x1]
    %67 = vrot.lane.b32.xlu0 %v66, 40
    %v68 = vpop.permute.xlu0 %67
    %vm69 = vcmask 392512
    %70 = vst.msk [vmem:[#allocation0] sm:$0x1] %vm69, %v68
    %s71 = scalar_lea.vmem %s0, 4
    %v72 = vld [vmem:[%s71] sm:$0x1]
    %73 = vrot.lane.b32.xlu0 %v72, 32
    %v74 = vpop.permute.xlu0 %73
    %vm75 = vcmask 326912
    %76 = vst.msk [vmem:[#allocation0] sm:$0x1] %vm75, %v74
    %s77 = scalar_lea.vmem %s0, 3
    %v78 = vld [vmem:[%s77] sm:$0x1]
    %79 = vrot.lane.b32.xlu0 %v78, 24
    %v80 = vpop.permute.xlu0 %79
    %vm81 = vcmask 261312
    %82 = vst.msk [vmem:[#allocation0] sm:$0x1] %vm81, %v80
    %s83 = scalar_lea.vmem %s0, 2
    %v84 = vld [vmem:[%s83] sm:$0x1]
    %85 = vrot.lane.b32.xlu0 %v84, 16
    %v86 = vpop.permute.xlu0 %85
    %vm87 = vcmask 195712
    %88 = vst.msk [vmem:[#allocation0] sm:$0x1] %vm87, %v86
    %s89 = scalar_lea.vmem %s0, 1
    %v90 = vld [vmem:[%s89] sm:$0x1]
    %91 = vrot.lane.b32.xlu0 %v90, 8
    %v92 = vpop.permute.xlu0 %91
    %vm93 = vcmask 130112
    %94 = vst.msk [vmem:[#allocation0] sm:$0x1] %vm93, %v92
    %s96 = sshll.u32 1, 1
    %s97 = ssub.s32 %s96, 1
    %v99 = vld [vmem:[#allocation0] sm:%s97]
    %s100 = sshll.u32 1, 1
    %s101 = ssub.s32 %s100, 1
    %102 = vst [vmem:[%s1] sm:%s101] %v99

// kernel: double_conv_in.1
$region0: #{double_conv_in.1}
  #allocation0 [shape = 'u32[]', space=smem, size = 0x4, offset = 0x4, fixed_abs, tag = 'smem constant byte address 0x4 - core index']
  #allocation1 [shape = 'u32[144,128]{1,0:T(1,128)}', space=vmem, size = 0x12000, scoped, tag = 'internal scratch']
  #allocation2 [shape = 'f32[18,64]{1,0:T(8,128)}', space=vmem, size = 0x3000, scoped, tag = 'scratch operand']
  #allocation3 [shape = 'f32[18,128]{1,0:T(8,128)}', space=vmem, size = 0x3000, scoped, tag = 'scratch operand']
  %s0 = inlined_call_operand.vmem [shape: bf16[2,16,64], index: 0, kind: input, shape index: {}]
  %s1 = inlined_call_operand.vmem [shape: bf16[3,64,128], index: 1, kind: input, shape index: {}]
  %s2 = inlined_call_operand.vmem [shape: bf16[3,128,128], index: 2, kind: input, shape index: {}]
  %s3 = inlined_call_operand.vmem [shape: f32[2,128], index: 3, kind: input, shape index: {}]
  %s4 = inlined_call_operand.vmem [shape: f32[2,128], index: 4, kind: input, shape index: {}]
  %s5 = inlined_call_operand.vmem [shape: f32[2,16,128], index: 5, kind: output, shape index: {}]
  %s6 = sld [smem:[#allocation0]]
  $region53: #{double_conv_in.1} parent=0
    _
  %s8 = ssub.s32 1, %s6
  %s9 = scalar_select 0, %s8, %s6
  loop: start=0, step=1, limit=4
  $region2: #{double_conv_in.1} parent=0 // loop_pre_header
    _
  $region3: #{double_conv_in.1} parent=0 // loop_header
    %s11 = sphi 0, %s15
    %p12 = scmp.ge.s32.totalorder %s11, 4
    %s21 = sphi 0, %s23
    %s24 = sphi 0, %s21
    %s25 = sphi 0, %s24
    %s41 = sphi 0, %s25
    %s45 = sphi 0, %s45
    %s47 = sphi 0, %s45
    %s48 = sphi 0, %s47
    %s62 = sphi 0, %s48
    %s66 = sphi 0, %s66
    %s68 = sphi 0, %s66
    %s69 = sphi 0, %s68
    %s83 = sphi 0, %s69
    %s87 = sphi 0, %s87
    %s89 = sphi 0, %s87
    %s90 = sphi 0, %s89
    %s104 = sphi 0, %s90
    %s108 = sphi 0, %s108
    %s110 = sphi 0, %s108
    %s111 = sphi 0, %s110
    %s125 = sphi 0, %s111
    %s131 = sphi 0, %s133
    %s134 = sphi 0, %s131
    %s135 = sphi 0, %s134
    %s151 = sphi 0, %s135
  $region4: #{double_conv_in.1} parent=0 // loop_header_branch
    %14 = sbr.rel (%p12) target = $region8
  $region5: #{double_conv_in.1} parent=0 // loop_body
    %s16 = ssub.s32 %s11, 1
    %s17 = ssub.s32 %s11, 2
    %s18 = sadd.s32 %s11, 1
    %s19 = ssub.s32 %s11, %s18
    %p20 = scmp.eq.s32.totalorder %s19, 0
    %s22 = sadd.s32 %s21, 1
    %s23 = scalar_select %p20, %s21, %s22
    %p26 = pneg %p20
    %p27 = scmp.eq.s32.totalorder %s11, 1
    %p28 = por %p26, %p27
    %p29 = scmp.ne.s32.totalorder %s21, %s24
    %p30 = scmp.eq.s32.totalorder %s11, 0
    %p31 = por %p29, %p30
    %p32 = scmp.ne.s32.totalorder %s21, %s24
    %p33 = scmp.eq.s32.totalorder %s16, 1
    %p34 = por %p32, %p33
    %p35 = scmp.ne.s32.totalorder %s24, %s25
    %p36 = scmp.eq.s32.totalorder %s16, 0
    %p37 = por %p35, %p36
    %p38 = scmp.ne.s32.totalorder %s24, %s25
    %p39 = scmp.eq.s32.totalorder %s17, 1
    %p40 = por %p38, %p39
    %p42 = scmp.ne.s32.totalorder %s25, %s41
    %p43 = scmp.eq.s32.totalorder %s17, 0
    %p44 = por %p42, %p43
    %s46 = sadd.s32 %s45, 1
    %p49 = scmp.eq.s32.totalorder %s11, 1
    %p50 = scmp.ne.s32.totalorder %s45, %s47
    %p51 = scmp.eq.s32.totalorder %s11, 0
    %p52 = por %p50, %p51
    %p53 = scmp.ne.s32.totalorder %s45, %s47
    %p54 = scmp.eq.s32.totalorder %s16, 1
    %p55 = por %p53, %p54
    %p56 = scmp.ne.s32.totalorder %s47, %s48
    %p57 = scmp.eq.s32.totalorder %s16, 0
    %p58 = por %p56, %p57
    %p59 = scmp.ne.s32.totalorder %s47, %s48
    %p60 = scmp.eq.s32.totalorder %s17, 1
    %p61 = por %p59, %p60
    %p63 = scmp.ne.s32.totalorder %s48, %s62
    %p64 = scmp.eq.s32.totalorder %s17, 0
    %p65 = por %p63, %p64
    %s67 = sadd.s32 %s66, 1
    %p70 = scmp.eq.s32.totalorder %s11, 1
    %p71 = scmp.ne.s32.totalorder %s66, %s68
    %p72 = scmp.eq.s32.totalorder %s11, 0
    %p73 = por %p71, %p72
    %p74 = scmp.ne.s32.totalorder %s66, %s68
    %p75 = scmp.eq.s32.totalorder %s16, 1
    %p76 = por %p74, %p75
    %p77 = scmp.ne.s32.totalorder %s68, %s69
    %p78 = scmp.eq.s32.totalorder %s16, 0
    %p79 = por %p77, %p78
    %p80 = scmp.ne.s32.totalorder %s68, %s69
    %p81 = scmp.eq.s32.totalorder %s17, 1
    %p82 = por %p80, %p81
    %p84 = scmp.ne.s32.totalorder %s69, %s83
    %p85 = scmp.eq.s32.totalorder %s17, 0
    %p86 = por %p84, %p85
    %s88 = sadd.s32 %s87, 1
    %p91 = scmp.eq.s32.totalorder %s11, 1
    %p92 = scmp.ne.s32.totalorder %s87, %s89
    %p93 = scmp.eq.s32.totalorder %s11, 0
    %p94 = por %p92, %p93
    %p95 = scmp.ne.s32.totalorder %s87, %s89
    %p96 = scmp.eq.s32.totalorder %s16, 1
    %p97 = por %p95, %p96
    %p98 = scmp.ne.s32.totalorder %s89, %s90
    %p99 = scmp.eq.s32.totalorder %s16, 0
    %p100 = por %p98, %p99
    %p101 = scmp.ne.s32.totalorder %s89, %s90
    %p102 = scmp.eq.s32.totalorder %s17, 1
    %p103 = por %p101, %p102
    %p105 = scmp.ne.s32.totalorder %s90, %s104
    %p106 = scmp.eq.s32.totalorder %s17, 0
    %p107 = por %p105, %p106
    %s109 = sadd.s32 %s108, 1
    %p112 = scmp.eq.s32.totalorder %s11, 1
    %p113 = scmp.ne.s32.totalorder %s108, %s110
    %p114 = scmp.eq.s32.totalorder %s11, 0
    %p115 = por %p113, %p114
    %p116 = scmp.ne.s32.totalorder %s108, %s110
    %p117 = scmp.eq.s32.totalorder %s16, 1
    %p118 = por %p116, %p117
    %p119 = scmp.ne.s32.totalorder %s110, %s111
    %p120 = scmp.eq.s32.totalorder %s16, 0
    %p121 = por %p119, %p120
    %p122 = scmp.ne.s32.totalorder %s110, %s111
    %p123 = scmp.eq.s32.totalorder %s17, 1
    %p124 = por %p122, %p123
    %p126 = scmp.ne.s32.totalorder %s111, %s125
    %p127 = scmp.eq.s32.totalorder %s17, 0
    %p128 = por %p126, %p127
    %s129 = ssub.s32 %s11, %s18
    %p130 = scmp.eq.s32.totalorder %s129, 0
    %s132 = sadd.s32 %s131, 1
    %s133 = scalar_select %p130, %s131, %s132
    %p136 = pneg %p130
    %p137 = scmp.eq.s32.totalorder %s11, 1
    %p138 = por %p136, %p137
    %p139 = scmp.ne.s32.totalorder %s131, %s134
    %p140 = scmp.eq.s32.totalorder %s11, 0
    %p141 = por %p139, %p140
    %p142 = scmp.ne.s32.totalorder %s131, %s134
    %p143 = scmp.eq.s32.totalorder %s16, 1
    %p144 = por %p142, %p143
    %p145 = scmp.ne.s32.totalorder %s134, %s135
    %p146 = scmp.eq.s32.totalorder %s16, 0
    %p147 = por %p145, %p146
    %p148 = scmp.ne.s32.totalorder %s134, %s135
    %p149 = scmp.eq.s32.totalorder %s17, 1
    %p150 = por %p148, %p149
    %p152 = scmp.ne.s32.totalorder %s135, %s151
    %p153 = scmp.eq.s32.totalorder %s17, 0
    %p154 = por %p152, %p153
    %p155 = scmp.le.s32.totalorder 1, %s11
    %p156 = scmp.lt.s32.totalorder %s11, 3
    %p157 = pnand %p155, %p156
    %p158 = pneg %p157
    // Predicated region
    $region9: #{double_conv_in.1} parent=5 // pred_check
      _
    $region10: #{double_conv_in.1} parent=5 // pred_check_branch
      %160 = sbr.rel (%p157) target = $region12
    $region11: #{double_conv_in.1} parent=5 // pred_region
      %s161 = ssub.s32 %s11, 1
      // Predicated region
      $region13: #{double_conv_in.1} parent=11 // pred_check
        %p162 = pneg %p58
      $region14: #{double_conv_in.1} parent=11 // pred_check_branch
        %164 = sbr.rel (%p162) target = $region16
      $region15: #{double_conv_in.1} parent=11 // pred_region
        _
      $region16: #{double_conv_in.1} parent=11 // pred_fallthru
        _
      // Predicated region
      $region17: #{double_conv_in.1} parent=11 // pred_check
        %p165 = pneg %p79
      $region18: #{double_conv_in.1} parent=11 // pred_check_branch
        %167 = sbr.rel (%p165) target = $region20
      $region19: #{double_conv_in.1} parent=11 // pred_region
        _
      $region20: #{double_conv_in.1} parent=11 // pred_fallthru
        _
      // Predicated region
      $region21: #{double_conv_in.1} parent=11 // pred_check
        %p168 = pneg %p100
      $region22: #{double_conv_in.1} parent=11 // pred_check_branch
        %170 = sbr.rel (%p168) target = $region24
      $region23: #{double_conv_in.1} parent=11 // pred_region
        _
      $region24: #{double_conv_in.1} parent=11 // pred_fallthru
        _
      // Predicated region
      $region25: #{double_conv_in.1} parent=11 // pred_check
        %p171 = pneg %p121
      $region26: #{double_conv_in.1} parent=11 // pred_check_branch
        %173 = sbr.rel (%p171) target = $region28
      $region27: #{double_conv_in.1} parent=11 // pred_region
        _
      $region28: #{double_conv_in.1} parent=11 // pred_fallthru
        _
    $region12: #{double_conv_in.1} parent=5 // pred_fallthru
      _
    %p174 = scmp.lt.s32.totalorder %s11, 2
    // Predicated region
    $region29: #{double_conv_in.1} parent=5 // pred_check
      %p175 = pneg %p174
    $region30: #{double_conv_in.1} parent=5 // pred_check_branch
      %177 = sbr.rel (%p175) target = $region32
    $region31: #{double_conv_in.1} parent=5 // pred_region
      // Predicated region
      $region33: #{double_conv_in.1} parent=31 // pred_check
        %p178 = pneg %p31
      $region34: #{double_conv_in.1} parent=31 // pred_check_branch
        %180 = sbr.rel (%p178) target = $region36
      $region35: #{double_conv_in.1} parent=31 // pred_region
        %p181 = scmp.lt.s32.totalorder %s11, 1
        %s182 = scalar_select %p181, %s11, 1
        %s183 = smul.addr %s182, 2
        %s184 = smul.addr %s183, 4
        %s185 = scalar_lea.vmem %s0, %s184
      $region36: #{double_conv_in.1} parent=31 // pred_fallthru
        _
    $region32: #{double_conv_in.1} parent=5 // pred_fallthru
      _
    %p186 = scmp.le.s32.totalorder 1, %s11
    %p187 = scmp.lt.s32.totalorder %s11, 3
    %p188 = pnand %p186, %p187
    %p189 = pneg %p188
    // Predicated region
    $region37: #{double_conv_in.1} parent=5 // pred_check
      _
    $region38: #{double_conv_in.1} parent=5 // pred_check_branch
      %191 = sbr.rel (%p188) target = $region40
    $region39: #{double_conv_in.1} parent=5 // pred_region
      %s192 = ssub.s32 %s11, 1
      %p193 = scmp.lt.s32.totalorder %s16, 1
      %s194 = scalar_select %p193, %s16, 1
      %s195 = smul.addr %s194, 2
      %s196 = smul.addr %s195, 4
      %s197 = scalar_lea.vmem %s0, %s196
      %p198 = pneg %p37
      %p199 = pneg %p34
      %p200 = pneg %p58
      %p201 = pneg %p55
      %p202 = pneg %p79
      %p203 = pneg %p76
      %p204 = pneg %p100
      %p205 = pneg %p97
      %p206 = pneg %p121
      %p207 = pneg %p118
      %p208 = pneg %p147
      %p209 = pneg %p144
      %p210 = scmp.lt.s32.totalorder %s16, 1
      %s211 = scalar_select %p210, %s16, 1
      %s212 = smul.addr %s211, 2
      %s213 = smul.addr %s212, 8
      %s214 = scalar_lea.vmem %s5, %s213
      %p215 = scmp.lt.s32.totalorder %s16, 1
      %s216 = scalar_select %p215, %s16, 1
      %s217 = smul.addr %s216, 2
      %s218 = smul.addr %s217, 4
      %s219 = scalar_lea.vmem %s0, %s218
      %p220 = scmp.lt.s32.totalorder %s16, 1
      %s221 = scalar_select %p220, %s16, 1
      %s222 = smul.addr %s221, 2
      %s223 = smul.addr %s222, 8
      %s224 = scalar_lea.vmem %s5, %s223
      %vm226 = vcmask 516096
      %227 = vst.msk [vmem:[#allocation2] sm:$0x1] %vm226, 0.0
      %228 = vst.msk [vmem:[#allocation2 + $0x11] sm:$0x1] %vm226, 0.0
      %v229 = vld [vmem:[%s219] sm:$0xf]
      %v230 = vld [vmem:[%s219 + $0x4] sm:$0xf]
      %v231 = vunpack.c.l.bf16 %v229
      %v232 = vunpack.c.l.bf16 %v230
      %vm233 = vcmask 523264
      %234 = vst.msk [vmem:[#allocation2 + $0x1] sm:$0xff] %vm233, %v231
      %235 = vst.msk [vmem:[#allocation2 + $0x9] sm:$0xff] %vm233, %v232
      %v236 = vld [vmem:[#allocation2] sm:$0xff]
      %v237 = vld [vmem:[#allocation2 + $0x8] sm:$0xff]
      %v238 = vpack.c.bf16 %v237, %v236
      %v239 = vld [vmem:[%s1] sm:$0xf]
      %v240 = vld [vmem:[%s1 + $0x4] sm:$0xf]
      %v241 = vld [vmem:[%s1 + $0x8] sm:$0xf]
      %v242 = vld [vmem:[%s1 + $0xc] sm:$0xf]
      %v243 = vld [vmem:[%s1 + $0x10] sm:$0xf]
      %v244 = vld [vmem:[%s1 + $0x14] sm:$0xf]
      %v245 = vld [vmem:[%s1 + $0x18] sm:$0xf]
      %v246 = vld [vmem:[%s1 + $0x1c] sm:$0xf]
      %v247 = vld [vmem:[#allocation2 + $0x1] sm:$0xff]
      %v248 = vld [vmem:[#allocation2 + $0x9] sm:$0xff]
      %v249 = vpack.c.bf16 %v248, %v247
      %s250 = scalar_lea.vmem %s1, 32
      %v251 = vld [vmem:[%s250] sm:$0xf]
      %v252 = vld [vmem:[%s250 + $0x4] sm:$0xf]
      %v253 = vld [vmem:[%s250 + $0x8] sm:$0xf]
      %v254 = vld [vmem:[%s250 + $0xc] sm:$0xf]
      %v255 = vld [vmem:[%s250 + $0x10] sm:$0xf]
      %v256 = vld [vmem:[%s250 + $0x14] sm:$0xf]
      %v257 = vld [vmem:[%s250 + $0x18] sm:$0xf]
      %v258 = vld [vmem:[%s250 + $0x1c] sm:$0xf]
      %v267 = vunpack.c.l.b16 %v251
      %v268 = vunpack.c.l.b16 %v252
      %v269 = vunpack.c.l.b16 %v253
      %v270 = vunpack.c.l.b16 %v254
      %v271 = vunpack.c.l.b16 %v255
      %v272 = vunpack.c.l.b16 %v256
      %v273 = vunpack.c.l.b16 %v257
      %v274 = vunpack.c.l.b16 %v258
      %v275 = vpack.c.b16 %v268, %v267
      %v276 = vpack.c.b16 %v270, %v269
      %v277 = vpack.c.b16 %v272, %v271
      %v278 = vpack.c.b16 %v274, %v273
      %v284 = vsel %vm233, %v249, 0
      %286 = vmatprep.subr.bf16.mxu0 0
      %287 = vmatpush1.bf16.msra.mxu0 0
      %288 = vmatprep.subr.bf16.mxu0 0
      %289 = vmatpush1.bf16.msra.mxu0 0
      %290 = vmatprep.subr.bf16.mxu0 0
      %291 = vmatpush1.bf16.msra.mxu0 0
      %292 = vmatprep.subr.bf16.mxu0 0
      %293 = vmatpush1.bf16.msra.mxu0 0
      %294 = vmatprep.subr.bf16.mxu0 0
      %295 = vmatpush1.bf16.msra.mxu0 %v278
      %296 = vmatprep.subr.bf16.mxu0 0
      %297 = vmatpush1.bf16.msra.mxu0 %v277
      %298 = vmatprep.subr.bf16.mxu0 0
      %299 = vmatpush1.bf16.msra.mxu0 %v276
      %300 = vmatprep.subr.bf16.mxu0 0
      %301 = vmatpush1.bf16.msra.mxu0 %v275
      %302 = vmatprep.subr.bf16.mxu0 0
      %303 = vmatpush2.bf16.msra.mxu0 0
      %304 = vmatprep.subr.bf16.mxu0 0
      %305 = vmatpush2.bf16.msra.mxu0 0
      %306 = vmatprep.subr.bf16.mxu0 0
      %307 = vmatpush2.bf16.msra.mxu0 0
      %308 = vmatprep.subr.bf16.mxu0 0
      %309 = vmatpush2.bf16.msra.mxu0 0
      %310 = vmatprep.subr.bf16.mxu0 0
      %311 = vmatpush2.bf16.msra.mxu0 0
      %312 = vmatprep.subr.bf16.mxu0 0
      %313 = vmatpush2.bf16.msra.mxu0 0
      %314 = vmatprep.subr.bf16.mxu0 0
      %315 = vmatpush2.bf16.msra.mxu0 0
      %316 = vmatprep.subr.bf16.mxu0 0
      %317 = vmatpush2.bf16.msra.mxu0 0
      %318 = vmatprep.mubr.bf16.mxu0 0
      %319 = vmatmul.mubr.bf16.gmra.mxu0 %v284
      %v320 = vpop.f32.mrf.mxu0
      %v321 = vadd.f32 0.0, %v320
      %v322 = vpop.f32.mrf.mxu0
      %v323 = vpop.f32.mrf.mxu0
      %v324 = vadd.f32 0.0, %v323
      %v325 = vpop.f32.mrf.mxu0
      %326 = vdwg.mxu0
      %v335 = vunpack.c.l.b16 %v239
      %v336 = vunpack.c.l.b16 %v240
      %v337 = vunpack.c.l.b16 %v241
      %v338 = vunpack.c.l.b16 %v242
      %v339 = vunpack.c.l.b16 %v243
      %v340 = vunpack.c.l.b16 %v244
      %v341 = vunpack.c.l.b16 %v245
      %v342 = vunpack.c.l.b16 %v246
      %v343 = vpack.c.b16 %v336, %v335
      %v344 = vpack.c.b16 %v338, %v337
      %v345 = vpack.c.b16 %v340, %v339
      %v346 = vpack.c.b16 %v342, %v341
      %v352 = vsel %vm233, %v238, 0
      %354 = vmatprep.subr.bf16.mxu0 0
      %355 = vmatpush1.bf16.msra.mxu0 0
      %356 = vmatprep.subr.bf16.mxu0 0
      %357 = vmatpush1.bf16.msra.mxu0 0
      %358 = vmatprep.subr.bf16.mxu0 0
      %359 = vmatpush1.bf16.msra.mxu0 0
      %360 = vmatprep.subr.bf16.mxu0 0
      %361 = vmatpush1.bf16.msra.mxu0 0
      %362 = vmatprep.subr.bf16.mxu0 0
      %363 = vmatpush1.bf16.msra.mxu0 %v346
      %364 = vmatprep.subr.bf16.mxu0 0
      %365 = vmatpush1.bf16.msra.mxu0 %v345
      %366 = vmatprep.subr.bf16.mxu0 0
      %367 = vmatpush1.bf16.msra.mxu0 %v344
      %368 = vmatprep.subr.bf16.mxu0 0
      %369 = vmatpush1.bf16.msra.mxu0 %v343
      %370 = vmatprep.subr.bf16.mxu0 0
      %371 = vmatpush2.bf16.msra.mxu0 0
      %372 = vmatprep.subr.bf16.mxu0 0
      %373 = vmatpush2.bf16.msra.mxu0 0
      %374 = vmatprep.subr.bf16.mxu0 0
      %375 = vmatpush2.bf16.msra.mxu0 0
      %376 = vmatprep.subr.bf16.mxu0 0
      %377 = vmatpush2.bf16.msra.mxu0 0
      %378 = vmatprep.subr.bf16.mxu0 0
      %379 = vmatpush2.bf16.msra.mxu0 0
      %380 = vmatprep.subr.bf16.mxu0 0
      %381 = vmatpush2.bf16.msra.mxu0 0
      %382 = vmatprep.subr.bf16.mxu0 0
      %383 = vmatpush2.bf16.msra.mxu0 0
      %384 = vmatprep.subr.bf16.mxu0 0
      %385 = vmatpush2.bf16.msra.mxu0 0
      %386 = vmatprep.mubr.bf16.mxu0 0
      %387 = vmatmul.mubr.bf16.gmra.mxu0 %v352
      %v388 = vpop.f32.mrf.mxu0
      %v389 = vadd.f32 %v321, %v388
      %v390 = vpop.f32.mrf.mxu0
      %v391 = vpop.f32.mrf.mxu0
      %v392 = vadd.f32 %v324, %v391
      %v393 = vpop.f32.mrf.mxu0
      %394 = vdwg.mxu0
      %v395 = vld [vmem:[#allocation2 + $0x2] sm:$0xff]
      %v396 = vld [vmem:[#allocation2 + $0xa] sm:$0xff]
      %v397 = vpack.c.bf16 %v396, %v395
      %s398 = scalar_lea.vmem %s1, 64
      %v399 = vld [vmem:[%s398] sm:$0xf]
      %v400 = vld [vmem:[%s398 + $0x4] sm:$0xf]
      %v401 = vld [vmem:[%s398 + $0x8] sm:$0xf]
      %v402 = vld [vmem:[%s398 + $0xc] sm:$0xf]
      %v403 = vld [vmem:[%s398 + $0x10] sm:$0xf]
      %v404 = vld [vmem:[%s398 + $0x14] sm:$0xf]
      %v405 = vld [vmem:[%s398 + $0x18] sm:$0xf]
      %v406 = vld [vmem:[%s398 + $0x1c] sm:$0xf]
      %v415 = vunpack.c.l.b16 %v399
      %v416 = vunpack.c.l.b16 %v400
      %v417 = vunpack.c.l.b16 %v401
      %v418 = vunpack.c.l.b16 %v402
      %v419 = vunpack.c.l.b16 %v403
      %v420 = vunpack.c.l.b16 %v404
      %v421 = vunpack.c.l.b16 %v405
      %v422 = vunpack.c.l.b16 %v406
      %v423 = vpack.c.b16 %v416, %v415
      %v424 = vpack.c.b16 %v418, %v417
      %v425 = vpack.c.b16 %v420, %v419
      %v426 = vpack.c.b16 %v422, %v421
      %v432 = vsel %vm233, %v397, 0
      %434 = vmatprep.subr.bf16.mxu0 0
      %435 = vmatpush1.bf16.msra.mxu0 0
      %436 = vmatprep.subr.bf16.mxu0 0
      %437 = vmatpush1.bf16.msra.mxu0 0
      %438 = vmatprep.subr.bf16.mxu0 0
      %439 = vmatpush1.bf16.msra.mxu0 0
      %440 = vmatprep.subr.bf16.mxu0 0
      %441 = vmatpush1.bf16.msra.mxu0 0
      %442 = vmatprep.subr.bf16.mxu0 0
      %443 = vmatpush1.bf16.msra.mxu0 %v426
      %444 = vmatprep.subr.bf16.mxu0 0
      %445 = vmatpush1.bf16.msra.mxu0 %v425
      %446 = vmatprep.subr.bf16.mxu0 0
      %447 = vmatpush1.bf16.msra.mxu0 %v424
      %448 = vmatprep.subr.bf16.mxu0 0
      %449 = vmatpush1.bf16.msra.mxu0 %v423
      %450 = vmatprep.subr.bf16.mxu0 0
      %451 = vmatpush2.bf16.msra.mxu0 0
      %452 = vmatprep.subr.bf16.mxu0 0
      %453 = vmatpush2.bf16.msra.mxu0 0
      %454 = vmatprep.subr.bf16.mxu0 0
      %455 = vmatpush2.bf16.msra.mxu0 0
      %456 = vmatprep.subr.bf16.mxu0 0
      %457 = vmatpush2.bf16.msra.mxu0 0
      %458 = vmatprep.subr.bf16.mxu0 0
      %459 = vmatpush2.bf16.msra.mxu0 0
      %460 = vmatprep.subr.bf16.mxu0 0
      %461 = vmatpush2.bf16.msra.mxu0 0
      %462 = vmatprep.subr.bf16.mxu0 0
      %463 = vmatpush2.bf16.msra.mxu0 0
      %464 = vmatprep.subr.bf16.mxu0 0
      %465 = vmatpush2.bf16.msra.mxu0 0
      %466 = vmatprep.mubr.bf16.mxu0 0
      %467 = vmatmul.mubr.bf16.gmra.mxu0 %v432
      %v468 = vpop.f32.mrf.mxu0
      %v469 = vadd.f32 0.0, %v468
      %v470 = vpop.f32.mrf.mxu0
      %v471 = vpop.f32.mrf.mxu0
      %v472 = vadd.f32 0.0, %v471
      %v473 = vpop.f32.mrf.mxu0
      %474 = vdwg.mxu0
      %v475 = vadd.f32 %v389, %v469
      %v476 = vadd.f32 %v392, %v472
      %v477 = vlaneseq
      %v478 = vshrl.u32 %v477, 7
      %v479 = vadd.s32 %v478, 8
      %v480 = vadd.s32 %v478, 16
      %v481 = vadd.s32 %v478, 24
      %v482 = vadd.s32 %v478, 32
      %v483 = vadd.s32 %v478, 40
      %v484 = vadd.s32 %v478, 48
      %v485 = vadd.s32 %v478, 56
      %v486 = vadd.s32 %v478, 64
      %v487 = vadd.s32 %v478, 72
      %v488 = vadd.s32 %v478, 80
      %v489 = vadd.s32 %v478, 88
      %v490 = vadd.s32 %v478, 96
      %v491 = vadd.s32 %v478, 104
      %v492 = vadd.s32 %v478, 112
      %v493 = vadd.s32 %v478, 120
      %vm494 = vcmp.lt.s32.totalorder %v478, 0
      %v495 = vsub.s32 0, %v478
      %v496 = vsel %vm494, %v495, %v478
      %v497 = vshrl.u32 %v496, 3
      %v498 = vand.u32 %v496, 7
      %v499 = vsub.s32 0, %v498
      %v500 = vsel %vm494, %v499, %v498
      %vm501 = vcmp.lt.s32.totalorder %v479, 0
      %v502 = vsub.s32 0, %v479
      %v503 = vsel %vm501, %v502, %v479
      %v504 = vshrl.u32 %v503, 3
      %v505 = vand.u32 %v503, 7
      %v506 = vsub.s32 0, %v505
      %v507 = vsel %vm501, %v506, %v505
      %vm508 = vcmp.lt.s32.totalorder %v480, 0
      %v509 = vsub.s32 0, %v480
      %v510 = vsel %vm508, %v509, %v480
      %v511 = vshrl.u32 %v510, 3
      %v512 = vand.u32 %v510, 7
      %v513 = vsub.s32 0, %v512
      %v514 = vsel %vm508, %v513, %v512
      %vm515 = vcmp.lt.s32.totalorder %v481, 0
      %v516 = vsub.s32 0, %v481
      %v517 = vsel %vm515, %v516, %v481
      %v518 = vshrl.u32 %v517, 3
      %v519 = vand.u32 %v517, 7
      %v520 = vsub.s32 0, %v519
      %v521 = vsel %vm515, %v520, %v519
      %vm522 = vcmp.lt.s32.totalorder %v482, 0
      %v523 = vsub.s32 0, %v482
      %v524 = vsel %vm522, %v523, %v482
      %v525 = vshrl.u32 %v524, 3
      %v526 = vand.u32 %v524, 7
      %v527 = vsub.s32 0, %v526
      %v528 = vsel %vm522, %v527, %v526
      %vm529 = vcmp.lt.s32.totalorder %v483, 0
      %v530 = vsub.s32 0, %v483
      %v531 = vsel %vm529, %v530, %v483
      %v532 = vshrl.u32 %v531, 3
      %v533 = vand.u32 %v531, 7
      %v534 = vsub.s32 0, %v533
      %v535 = vsel %vm529, %v534, %v533
      %vm536 = vcmp.lt.s32.totalorder %v484, 0
      %v537 = vsub.s32 0, %v484
      %v538 = vsel %vm536, %v537, %v484
      %v539 = vshrl.u32 %v538, 3
      %v540 = vand.u32 %v538, 7
      %v541 = vsub.s32 0, %v540
      %v542 = vsel %vm536, %v541, %v540
      %vm543 = vcmp.lt.s32.totalorder %v485, 0
      %v544 = vsub.s32 0, %v485
      %v545 = vsel %vm543, %v544, %v485
      %v546 = vshrl.u32 %v545, 3
      %v547 = vand.u32 %v545, 7
      %v548 = vsub.s32 0, %v547
      %v549 = vsel %vm543, %v548, %v547
      %vm550 = vcmp.lt.s32.totalorder %v486, 0
      %v551 = vsub.s32 0, %v486
      %v552 = vsel %vm550, %v551, %v486
      %v553 = vshrl.u32 %v552, 3
      %v554 = vand.u32 %v552, 7
      %v555 = vsub.s32 0, %v554
      %v556 = vsel %vm550, %v555, %v554
      %vm557 = vcmp.lt.s32.totalorder %v487, 0
      %v558 = vsub.s32 0, %v487
      %v559 = vsel %vm557, %v558, %v487
      %v560 = vshrl.u32 %v559, 3
      %v561 = vand.u32 %v559, 7
      %v562 = vsub.s32 0, %v561
      %v563 = vsel %vm557, %v562, %v561
      %vm564 = vcmp.lt.s32.totalorder %v488, 0
      %v565 = vsub.s32 0, %v488
      %v566 = vsel %vm564, %v565, %v488
      %v567 = vshrl.u32 %v566, 3
      %v568 = vand.u32 %v566, 7
      %v569 = vsub.s32 0, %v568
      %v570 = vsel %vm564, %v569, %v568
      %vm571 = vcmp.lt.s32.totalorder %v489, 0
      %v572 = vsub.s32 0, %v489
      %v573 = vsel %vm571, %v572, %v489
      %v574 = vshrl.u32 %v573, 3
      %v575 = vand.u32 %v573, 7
      %v576 = vsub.s32 0, %v575
      %v577 = vsel %vm571, %v576, %v575
      %vm578 = vcmp.lt.s32.totalorder %v490, 0
      %v579 = vsub.s32 0, %v490
      %v580 = vsel %vm578, %v579, %v490
      %v581 = vshrl.u32 %v580, 3
      %v582 = vand.u32 %v580, 7
      %v583 = vsub.s32 0, %v582
      %v584 = vsel %vm578, %v583, %v582
      %vm585 = vcmp.lt.s32.totalorder %v491, 0
      %v586 = vsub.s32 0, %v491
      %v587 = vsel %vm585, %v586, %v491
      %v588 = vshrl.u32 %v587, 3
      %v589 = vand.u32 %v587, 7
      %v590 = vsub.s32 0, %v589
      %v591 = vsel %vm585, %v590, %v589
      %vm592 = vcmp.lt.s32.totalorder %v492, 0
      %v593 = vsub.s32 0, %v492
      %v594 = vsel %vm592, %v593, %v492
      %v595 = vshrl.u32 %v594, 3
      %v596 = vand.u32 %v594, 7
      %v597 = vsub.s32 0, %v596
      %v598 = vsel %vm592, %v597, %v596
      %vm599 = vcmp.lt.s32.totalorder %v493, 0
      %v600 = vsub.s32 0, %v493
      %v601 = vsel %vm599, %v600, %v493
      %v602 = vshrl.u32 %v601, 3
      %v603 = vand.u32 %v601, 7
      %v604 = vsub.s32 0, %v603
      %v605 = vsel %vm599, %v604, %v603
      %vm606 = vcmp.ne.s32.totalorder %v500, 0
      %vm607 = vcmp.ne.s32.totalorder %v507, 0
      %vm608 = vcmp.ne.s32.totalorder %v514, 0
      %vm609 = vcmp.ne.s32.totalorder %v521, 0
      %vm610 = vcmp.ne.s32.totalorder %v528, 0
      %vm611 = vcmp.ne.s32.totalorder %v535, 0
      %vm612 = vcmp.ne.s32.totalorder %v542, 0
      %vm613 = vcmp.ne.s32.totalorder %v549, 0
      %vm614 = vcmp.ne.s32.totalorder %v556, 0
      %vm615 = vcmp.ne.s32.totalorder %v563, 0
      %vm616 = vcmp.ne.s32.totalorder %v570, 0
      %vm617 = vcmp.ne.s32.totalorder %v577, 0
      %vm618 = vcmp.ne.s32.totalorder %v584, 0
      %vm619 = vcmp.ne.s32.totalorder %v591, 0
      %vm620 = vcmp.ne.s32.totalorder %v598, 0
      %vm621 = vcmp.ne.s32.totalorder %v605, 0
      %vm622 = vcmp.lt.s32.totalorder %v500, 0
      %vm623 = vcmp.lt.s32.totalorder %v507, 0
      %vm624 = vcmp.lt.s32.totalorder %v514, 0
      %vm625 = vcmp.lt.s32.totalorder %v521, 0
      %vm626 = vcmp.lt.s32.totalorder %v528, 0
      %vm627 = vcmp.lt.s32.totalorder %v535, 0
      %vm628 = vcmp.lt.s32.totalorder %v542, 0
      %vm629 = vcmp.lt.s32.totalorder %v549, 0
      %vm630 = vcmp.lt.s32.totalorder %v556, 0
      %vm631 = vcmp.lt.s32.totalorder %v563, 0
      %vm632 = vcmp.lt.s32.totalorder %v570, 0
      %vm633 = vcmp.lt.s32.totalorder %v577, 0
      %vm634 = vcmp.lt.s32.totalorder %v584, 0
      %vm635 = vcmp.lt.s32.totalorder %v591, 0
      %vm636 = vcmp.lt.s32.totalorder %v598, 0
      %vm637 = vcmp.lt.s32.totalorder %v605, 0
      %vm638 = vmand %vm622, %vm606
      %vm639 = vmand %vm623, %vm607
      %vm640 = vmand %vm624, %vm608
      %vm641 = vmand %vm625, %vm609
      %vm642 = vmand %vm626, %vm610
      %vm643 = vmand %vm627, %vm611
      %vm644 = vmand %vm628, %vm612
      %vm645 = vmand %vm629, %vm613
      %vm646 = vmand %vm630, %vm614
      %vm647 = vmand %vm631, %vm615
      %vm648 = vmand %vm632, %vm616
      %vm649 = vmand %vm633, %vm617
      %vm650 = vmand %vm634, %vm618
      %vm651 = vmand %vm635, %vm619
      %vm652 = vmand %vm636, %vm620
      %vm653 = vmand %vm637, %vm621
      %v654 = vadd.s32 %v500, 8
      %v655 = vadd.s32 %v507, 8
      %v656 = vadd.s32 %v514, 8
      %v657 = vadd.s32 %v521, 8
      %v658 = vadd.s32 %v528, 8
      %v659 = vadd.s32 %v535, 8
      %v660 = vadd.s32 %v542, 8
      %v661 = vadd.s32 %v549, 8
      %v662 = vadd.s32 %v556, 8
      %v663 = vadd.s32 %v563, 8
      %v664 = vadd.s32 %v570, 8
      %v665 = vadd.s32 %v577, 8
      %v666 = vadd.s32 %v584, 8
      %v667 = vadd.s32 %v591, 8
      %v668 = vadd.s32 %v598, 8
      %v669 = vadd.s32 %v605, 8
      %v670 = vsel %vm638, %v654, %v500
      %v671 = vsel %vm639, %v655, %v507
      %v672 = vsel %vm640, %v656, %v514
      %v673 = vsel %vm641, %v657, %v521
      %v674 = vsel %vm642, %v658, %v528
      %v675 = vsel %vm643, %v659, %v535
      %v676 = vsel %vm644, %v660, %v542
      %v677 = vsel %vm645, %v661, %v549
      %v678 = vsel %vm646, %v662, %v556
      %v679 = vsel %vm647, %v663, %v563
      %v680 = vsel %vm648, %v664, %v570
      %v681 = vsel %vm649, %v665, %v577
      %v682 = vsel %vm650, %v666, %v584
      %v683 = vsel %vm651, %v667, %v591
      %v684 = vsel %vm652, %v668, %v598
      %v685 = vsel %vm653, %v669, %v605
      %v686 = vlaneseq
      %v687 = vand.u32 %v686, 127
      %vm688 = vcmp.eq.s32.totalorder %v670, %v687
      %vm689 = vcmp.eq.s32.totalorder %v671, %v687
      %vm690 = vcmp.eq.s32.totalorder %v672, %v687
      %vm691 = vcmp.eq.s32.totalorder %v673, %v687
      %vm692 = vcmp.eq.s32.totalorder %v674, %v687
      %vm693 = vcmp.eq.s32.totalorder %v675, %v687
      %vm694 = vcmp.eq.s32.totalorder %v676, %v687
      %vm695 = vcmp.eq.s32.totalorder %v677, %v687
      %vm696 = vcmp.eq.s32.totalorder %v678, %v687
      %vm697 = vcmp.eq.s32.totalorder %v679, %v687
      %vm698 = vcmp.eq.s32.totalorder %v680, %v687
      %vm699 = vcmp.eq.s32.totalorder %v681, %v687
      %vm700 = vcmp.eq.s32.totalorder %v682, %v687
      %vm701 = vcmp.eq.s32.totalorder %v683, %v687
      %vm702 = vcmp.eq.s32.totalorder %v684, %v687
      %vm703 = vcmp.eq.s32.totalorder %v685, %v687
      %v704 = vsel %vm688, 1, 0
      %v705 = vsel %vm689, 1, 0
      %v706 = vsel %vm690, 1, 0
      %v707 = vsel %vm691, 1, 0
      %v708 = vsel %vm692, 1, 0
      %v709 = vsel %vm693, 1, 0
      %v710 = vsel %vm694, 1, 0
      %v711 = vsel %vm695, 1, 0
      %v712 = vsel %vm696, 1, 0
      %v713 = vsel %vm697, 1, 0
      %v714 = vsel %vm698, 1, 0
      %v715 = vsel %vm699, 1, 0
      %v716 = vsel %vm700, 1, 0
      %v717 = vsel %vm701, 1, 0
      %v718 = vsel %vm702, 1, 0
      %v719 = vsel %vm703, 1, 0
      %v720 = vcvt.s32.f32 %v704
      %v721 = vcvt.s32.f32 %v705
      %v722 = vcvt.s32.f32 %v706
      %v723 = vcvt.s32.f32 %v707
      %v724 = vcvt.s32.f32 %v708
      %v725 = vcvt.s32.f32 %v709
      %v726 = vcvt.s32.f32 %v710
      %v727 = vcvt.s32.f32 %v711
      %v728 = vcvt.s32.f32 %v712
      %v729 = vcvt.s32.f32 %v713
      %v730 = vcvt.s32.f32 %v714
      %v731 = vcvt.s32.f32 %v715
      %v732 = vcvt.s32.f32 %v716
      %v733 = vcvt.s32.f32 %v717
      %v734 = vcvt.s32.f32 %v718
      %v735 = vcvt.s32.f32 %v719
      %vm736 = vcmp.lt.s32.totalorder %v687, 0
      %v737 = vsub.s32 0, %v687
      %v738 = vsel %vm736, %v737, %v687
      %v739 = vshrl.u32 %v738, 3
      %v740 = vand.u32 %v738, 7
      %v741 = vsub.s32 0, %v740
      %v742 = vsel %vm736, %v741, %v740
      %vm743 = vcmp.ne.s32.totalorder %v742, 0
      %vm744 = vcmp.lt.s32.totalorder %v742, 0
      %vm745 = vmand %vm744, %vm743
      %v746 = vadd.s32 %v742, 8
      %v747 = vsel %vm745, %v746, %v742
      %vm748 = vcmp.eq.s32.totalorder %v478, %v747
      %v749 = vsel %vm748, 1, 0
      %v750 = vcvt.s32.f32 %v749
      %v751 = vadd.f32 %v475, %v476
      %v752 = vrot.slane %v751, 4
      %v753 = vadd.f32 %v751, %v752
      %v754 = vrot.slane %v753, 2
      %v755 = vadd.f32 %v753, %v754
      %v756 = vrot.slane %v755, 1
      %v757 = vadd.f32 %v755, %v756
      %758 = vmatprep.subr.mxu0 0.0
      %759 = vmatpush1.msra.mxu0 %v735
      %760 = vmatprep.subr.mxu0 0.0
      %761 = vmatpush1.msra.mxu0 %v734
      %762 = vmatprep.subr.mxu0 0.0
      %763 = vmatpush1.msra.mxu0 %v733
      %764 = vmatprep.subr.mxu0 0.0
      %765 = vmatpush1.msra.mxu0 %v732
      %766 = vmatprep.subr.mxu0 0.0
      %767 = vmatpush1.msra.mxu0 %v731
      %768 = vmatprep.subr.mxu0 0.0
      %769 = vmatpush1.msra.mxu0 %v730
      %770 = vmatprep.subr.mxu0 0.0
      %771 = vmatpush1.msra.mxu0 %v729
      %772 = vmatprep.subr.mxu0 0.0
      %773 = vmatpush1.msra.mxu0 %v728
      %774 = vmatprep.subr.mxu0 0.0
      %775 = vmatpush1.msra.mxu0 %v727
      %776 = vmatprep.subr.mxu0 0.0
      %777 = vmatpush1.msra.mxu0 %v726
      %778 = vmatprep.subr.mxu0 0.0
      %779 = vmatpush1.msra.mxu0 %v725
      %780 = vmatprep.subr.mxu0 0.0
      %781 = vmatpush1.msra.mxu0 %v724
      %782 = vmatprep.subr.mxu0 0.0
      %783 = vmatpush1.msra.mxu0 %v723
      %784 = vmatprep.subr.mxu0 0.0
      %785 = vmatpush1.msra.mxu0 %v722
      %786 = vmatprep.subr.mxu0 0.0
      %787 = vmatpush1.msra.mxu0 %v721
      %788 = vmatprep.subr.mxu0 0.0
      %789 = vmatpush1.msra.mxu0 %v720
      %790 = vmatprep.subr.mxu0 0.0
      %791 = vmatpush2.msra.mxu0 0.0
      %792 = vmatprep.subr.mxu0 0.0
      %793 = vmatpush2.msra.mxu0 0.0
      %794 = vmatprep.subr.mxu0 0.0
      %795 = vmatpush2.msra.mxu0 0.0
      %796 = vmatprep.subr.mxu0 0.0
      %797 = vmatpush2.msra.mxu0 0.0
      %798 = vmatprep.subr.mxu0 0.0
      %799 = vmatpush2.msra.mxu0 0.0
      %800 = vmatprep.subr.mxu0 0.0
      %801 = vmatpush2.msra.mxu0 0.0
      %802 = vmatprep.subr.mxu0 0.0
      %803 = vmatpush2.msra.mxu0 0.0
      %804 = vmatprep.subr.mxu0 0.0
      %805 = vmatpush2.msra.mxu0 0.0
      %806 = vmatprep.subr.mxu0 0.0
      %807 = vmatpush2.msra.mxu0 0.0
      %808 = vmatprep.subr.mxu0 0.0
      %809 = vmatpush2.msra.mxu0 0.0
      %810 = vmatprep.subr.mxu0 0.0
      %811 = vmatpush2.msra.mxu0 0.0
      %812 = vmatprep.subr.mxu0 0.0
      %813 = vmatpush2.msra.mxu0 0.0
      %814 = vmatprep.subr.mxu0 0.0
      %815 = vmatpush2.msra.mxu0 0.0
      %816 = vmatprep.subr.mxu0 0.0
      %817 = vmatpush2.msra.mxu0 0.0
      %818 = vmatprep.subr.mxu0 0.0
      %819 = vmatpush2.msra.mxu0 0.0
      %820 = vmatprep.subr.mxu0 0.0
      %821 = vmatpush2.msra.mxu0 0.0
      %822 = vmatprep.mubr.f32.mxu0 0.0
      %823 = vmatmul.mubr.f32.gmra.mxu0 %v757
      %v824 = vpop.f32.mrf.mxu0
      %v825 = vadd.f32 0.0, %v824
      %v826 = vpop.f32.mrf.mxu0
      %827 = vdwg.mxu0
      %v828 = vmul.f32 %v825, 0.00390625
      %vm829 = vcmask 64512
      %v831 = vsel %vm829, %v828, 0
      %833 = vmatprep.subr.mxu0 0.0
      %834 = vmatpush1.msra.mxu0 0.0
      %835 = vmatprep.subr.mxu0 0.0
      %836 = vmatpush1.msra.mxu0 0.0
      %837 = vmatprep.subr.mxu0 0.0
      %838 = vmatpush1.msra.mxu0 0.0
      %839 = vmatprep.subr.mxu0 0.0
      %840 = vmatpush1.msra.mxu0 0.0
      %841 = vmatprep.subr.mxu0 0.0
      %842 = vmatpush1.msra.mxu0 0.0
      %843 = vmatprep.subr.mxu0 0.0
      %844 = vmatpush1.msra.mxu0 0.0
      %845 = vmatprep.subr.mxu0 0.0
      %846 = vmatpush1.msra.mxu0 0.0
      %847 = vmatprep.subr.mxu0 0.0
      %848 = vmatpush1.msra.mxu0 0.0
      %849 = vmatprep.subr.mxu0 0.0
      %850 = vmatpush1.msra.mxu0 0.0
      %851 = vmatprep.subr.mxu0 0.0
      %852 = vmatpush1.msra.mxu0 0.0
      %853 = vmatprep.subr.mxu0 0.0
      %854 = vmatpush1.msra.mxu0 0.0
      %855 = vmatprep.subr.mxu0 0.0
      %856 = vmatpush1.msra.mxu0 0.0
      %857 = vmatprep.subr.mxu0 0.0
      %858 = vmatpush1.msra.mxu0 0.0
      %859 = vmatprep.subr.mxu0 0.0
      %860 = vmatpush1.msra.mxu0 0.0
      %861 = vmatprep.subr.mxu0 0.0
      %862 = vmatpush1.msra.mxu0 0.0
      %863 = vmatprep.subr.mxu0 0.0
      %864 = vmatpush1.msra.mxu0 %v750
      %865 = vmatprep.subr.mxu0 0.0
      %866 = vmatpush2.msra.mxu0 0.0
      %867 = vmatprep.subr.mxu0 0.0
      %868 = vmatpush2.msra.mxu0 0.0
      %869 = vmatprep.subr.mxu0 0.0
      %870 = vmatpush2.msra.mxu0 0.0
      %871 = vmatprep.subr.mxu0 0.0
      %872 = vmatpush2.msra.mxu0 0.0
      %873 = vmatprep.subr.mxu0 0.0
      %874 = vmatpush2.msra.mxu0 0.0
      %875 = vmatprep.subr.mxu0 0.0
      %876 = vmatpush2.msra.mxu0 0.0
      %877 = vmatprep.subr.mxu0 0.0
      %878 = vmatpush2.msra.mxu0 0.0
      %879 = vmatprep.subr.mxu0 0.0
      %880 = vmatpush2.msra.mxu0 0.0
      %881 = vmatprep.subr.mxu0 0.0
      %882 = vmatpush2.msra.mxu0 0.0
      %883 = vmatprep.subr.mxu0 0.0
      %884 = vmatpush2.msra.mxu0 0.0
      %885 = vmatprep.subr.mxu0 0.0
      %886 = vmatpush2.msra.mxu0 0.0
      %887 = vmatprep.subr.mxu0 0.0
      %888 = vmatpush2.msra.mxu0 0.0
      %889 = vmatprep.subr.mxu0 0.0
      %890 = vmatpush2.msra.mxu0 0.0
      %891 = vmatprep.subr.mxu0 0.0
      %892 = vmatpush2.msra.mxu0 0.0
      %893 = vmatprep.subr.mxu0 0.0
      %894 = vmatpush2.msra.mxu0 0.0
      %895 = vmatprep.subr.mxu0 0.0
      %896 = vmatpush2.msra.mxu0 0.0
      %897 = vmatprep.mubr.f32.mxu0 0.0
      %898 = vmatmul.mubr.f32.gmra.mxu0 %v831
      %v899 = vpop.f32.mrf.mxu0
      %v900 = vadd.f32 0.0, %v899
      %v901 = vpop.f32.mrf.mxu0
      %902 = vdwg.mxu0
      %v903 = vlaneseq
      %v904 = vshrl.u32 %v903, 7
      %v905 = vsub.s32 0, %v904
      %v906 = vrot.slane %v900, %v905
      %v907 = vsub.f32 %v475, %v906
      %v908 = vsub.f32 %v476, %v906
      %v909 = vmul.f32 %v907, %v907
      %v910 = vmul.f32 %v908, %v908
      %v911 = vadd.f32 %v909, %v910
      %v912 = vrot.slane %v911, 4
      %v913 = vadd.f32 %v911, %v912
      %v914 = vrot.slane %v913, 2
      %v915 = vadd.f32 %v913, %v914
      %v916 = vrot.slane %v915, 1
      %v917 = vadd.f32 %v915, %v916
      %918 = vmatprep.subr.mxu0 0.0
      %919 = vmatpush1.msra.mxu0 %v735
      %920 = vmatprep.subr.mxu0 0.0
      %921 = vmatpush1.msra.mxu0 %v734
      %922 = vmatprep.subr.mxu0 0.0
      %923 = vmatpush1.msra.mxu0 %v733
      %924 = vmatprep.subr.mxu0 0.0
      %925 = vmatpush1.msra.mxu0 %v732
      %926 = vmatprep.subr.mxu0 0.0
      %927 = vmatpush1.msra.mxu0 %v731
      %928 = vmatprep.subr.mxu0 0.0
      %929 = vmatpush1.msra.mxu0 %v730
      %930 = vmatprep.subr.mxu0 0.0
      %931 = vmatpush1.msra.mxu0 %v729
      %932 = vmatprep.subr.mxu0 0.0
      %933 = vmatpush1.msra.mxu0 %v728
      %934 = vmatprep.subr.mxu0 0.0
      %935 = vmatpush1.msra.mxu0 %v727
      %936 = vmatprep.subr.mxu0 0.0
      %937 = vmatpush1.msra.mxu0 %v726
      %938 = vmatprep.subr.mxu0 0.0
      %939 = vmatpush1.msra.mxu0 %v725
      %940 = vmatprep.subr.mxu0 0.0
      %941 = vmatpush1.msra.mxu0 %v724
      %942 = vmatprep.subr.mxu0 0.0
      %943 = vmatpush1.msra.mxu0 %v723
      %944 = vmatprep.subr.mxu0 0.0
      %945 = vmatpush1.msra.mxu0 %v722
      %946 = vmatprep.subr.mxu0 0.0
      %947 = vmatpush1.msra.mxu0 %v721
      %948 = vmatprep.subr.mxu0 0.0
      %949 = vmatpush1.msra.mxu0 %v720
      %950 = vmatprep.subr.mxu0 0.0
      %951 = vmatpush2.msra.mxu0 0.0
      %952 = vmatprep.subr.mxu0 0.0
      %953 = vmatpush2.msra.mxu0 0.0
      %954 = vmatprep.subr.mxu0 0.0
      %955 = vmatpush2.msra.mxu0 0.0
      %956 = vmatprep.subr.mxu0 0.0
      %957 = vmatpush2.msra.mxu0 0.0
      %958 = vmatprep.subr.mxu0 0.0
      %959 = vmatpush2.msra.mxu0 0.0
      %960 = vmatprep.subr.mxu0 0.0
      %961 = vmatpush2.msra.mxu0 0.0
      %962 = vmatprep.subr.mxu0 0.0
      %963 = vmatpush2.msra.mxu0 0.0
      %964 = vmatprep.subr.mxu0 0.0
      %965 = vmatpush2.msra.mxu0 0.0
      %966 = vmatprep.subr.mxu0 0.0
      %967 = vmatpush2.msra.mxu0 0.0
      %968 = vmatprep.subr.mxu0 0.0
      %969 = vmatpush2.msra.mxu0 0.0
      %970 = vmatprep.subr.mxu0 0.0
      %971 = vmatpush2.msra.mxu0 0.0
      %972 = vmatprep.subr.mxu0 0.0
      %973 = vmatpush2.msra.mxu0 0.0
      %974 = vmatprep.subr.mxu0 0.0
      %975 = vmatpush2.msra.mxu0 0.0
      %976 = vmatprep.subr.mxu0 0.0
      %977 = vmatpush2.msra.mxu0 0.0
      %978 = vmatprep.subr.mxu0 0.0
      %979 = vmatpush2.msra.mxu0 0.0
      %980 = vmatprep.subr.mxu0 0.0
      %981 = vmatpush2.msra.mxu0 0.0
      %982 = vmatprep.mubr.f32.mxu0 0.0
      %983 = vmatmul.mubr.f32.gmra.mxu0 %v917
      %v984 = vpop.f32.mrf.mxu0
      %v985 = vadd.f32 0.0, %v984
      %v986 = vpop.f32.mrf.mxu0
      %987 = vdwg.mxu0
      %v988 = vmul.f32 %v985, 0.00390625
      %v989 = vadd.f32 %v988, 1e-05
      %v990 = vrsqrt.pop %v989
      %v992 = vsel %vm829, %v990, 0
      %994 = vmatprep.subr.mxu0 0.0
      %995 = vmatpush1.msra.mxu0 0.0
      %996 = vmatprep.subr.mxu0 0.0
      %997 = vmatpush1.msra.mxu0 0.0
      %998 = vmatprep.subr.mxu0 0.0
      %999 = vmatpush1.msra.mxu0 0.0
      %1000 = vmatprep.subr.mxu0 0.0
      %1001 = vmatpush1.msra.mxu0 0.0
      %1002 = vmatprep.subr.mxu0 0.0
      %1003 = vmatpush1.msra.mxu0 0.0
      %1004 = vmatprep.subr.mxu0 0.0
      %1005 = vmatpush1.msra.mxu0 0.0
      %1006 = vmatprep.subr.mxu0 0.0
      %1007 = vmatpush1.msra.mxu0 0.0
      %1008 = vmatprep.subr.mxu0 0.0
      %1009 = vmatpush1.msra.mxu0 0.0
      %1010 = vmatprep.subr.mxu0 0.0
      %1011 = vmatpush1.msra.mxu0 0.0
      %1012 = vmatprep.subr.mxu0 0.0
      %1013 = vmatpush1.msra.mxu0 0.0
      %1014 = vmatprep.subr.mxu0 0.0
      %1015 = vmatpush1.msra.mxu0 0.0
      %1016 = vmatprep.subr.mxu0 0.0
      %1017 = vmatpush1.msra.mxu0 0.0
      %1018 = vmatprep.subr.mxu0 0.0
      %1019 = vmatpush1.msra.mxu0 0.0
      %1020 = vmatprep.subr.mxu0 0.0
      %1021 = vmatpush1.msra.mxu0 0.0
      %1022 = vmatprep.subr.mxu0 0.0
      %1023 = vmatpush1.msra.mxu0 0.0
      %1024 = vmatprep.subr.mxu0 0.0
      %1025 = vmatpush1.msra.mxu0 %v750
      %1026 = vmatprep.subr.mxu0 0.0
      %1027 = vmatpush2.msra.mxu0 0.0
      %1028 = vmatprep.subr.mxu0 0.0
      %1029 = vmatpush2.msra.mxu0 0.0
      %1030 = vmatprep.subr.mxu0 0.0
      %1031 = vmatpush2.msra.mxu0 0.0
      %1032 = vmatprep.subr.mxu0 0.0
      %1033 = vmatpush2.msra.mxu0 0.0
      %1034 = vmatprep.subr.mxu0 0.0
      %1035 = vmatpush2.msra.mxu0 0.0
      %1036 = vmatprep.subr.mxu0 0.0
      %1037 = vmatpush2.msra.mxu0 0.0
      %1038 = vmatprep.subr.mxu0 0.0
      %1039 = vmatpush2.msra.mxu0 0.0
      %1040 = vmatprep.subr.mxu0 0.0
      %1041 = vmatpush2.msra.mxu0 0.0
      %1042 = vmatprep.subr.mxu0 0.0
      %1043 = vmatpush2.msra.mxu0 0.0
      %1044 = vmatprep.subr.mxu0 0.0
      %1045 = vmatpush2.msra.mxu0 0.0
      %1046 = vmatprep.subr.mxu0 0.0
      %1047 = vmatpush2.msra.mxu0 0.0
      %1048 = vmatprep.subr.mxu0 0.0
      %1049 = vmatpush2.msra.mxu0 0.0
      %1050 = vmatprep.subr.mxu0 0.0
      %1051 = vmatpush2.msra.mxu0 0.0
      %1052 = vmatprep.subr.mxu0 0.0
      %1053 = vmatpush2.msra.mxu0 0.0
      %1054 = vmatprep.subr.mxu0 0.0
      %1055 = vmatpush2.msra.mxu0 0.0
      %1056 = vmatprep.subr.mxu0 0.0
      %1057 = vmatpush2.msra.mxu0 0.0
      %1058 = vmatprep.mubr.f32.mxu0 0.0
      %1059 = vmatmul.mubr.f32.gmra.mxu0 %v992
      %v1060 = vpop.f32.mrf.mxu0
      %v1061 = vadd.f32 0.0, %v1060
      %v1062 = vpop.f32.mrf.mxu0
      %1063 = vdwg.mxu0
      %v1064 = vld [vmem:[%s3] sm:$0x1]
      %v1065 = vmul.f32 %v1061, %v1064
      %v1066 = vlaneseq
      %v1067 = vshrl.u32 %v1066, 7
      %v1068 = vsub.s32 0, %v1067
      %v1069 = vrot.slane %v1065, %v1068
      %v1070 = vmul.f32 %v907, %v1069
      %v1071 = vmul.f32 %v908, %v1069
      %v1072 = vld [vmem:[%s3 + $0x1] sm:$0x1]
      %v1073 = vlaneseq
      %v1074 = vshrl.u32 %v1073, 7
      %v1075 = vsub.s32 0, %v1074
      %v1076 = vrot.slane %v1072, %v1075
      %v1077 = vadd.f32 %v1070, %v1076
      %v1078 = vadd.f32 %v1071, %v1076
      %v1079 = vmax.f32 %v1077, 0.0
      %v1080 = vmax.f32 %v1078, 0.0
      %1081 = vst [vmem:[#allocation3] sm:$0x1] 0.0
      %1082 = vst [vmem:[#allocation3 + $0x11] sm:$0x1] 0.0
      %1083 = vst [vmem:[#allocation3 + $0x1] sm:$0xff] %v1079
      %1084 = vst [vmem:[#allocation3 + $0x9] sm:$0xff] %v1080
      %v1085 = vld [vmem:[#allocation3] sm:$0xff]
      %v1086 = vld [vmem:[#allocation3 + $0x8] sm:$0xff]
      %v1087 = vpack.c.bf16 %v1086, %v1085
      %v1088 = vld [vmem:[%s2] sm:$0xf]
      %v1089 = vld [vmem:[%s2 + $0x4] sm:$0xf]
      %v1090 = vld [vmem:[%s2 + $0x8] sm:$0xf]
      %v1091 = vld [vmem:[%s2 + $0xc] sm:$0xf]
      %v1092 = vld [vmem:[%s2 + $0x10] sm:$0xf]
      %v1093 = vld [vmem:[%s2 + $0x14] sm:$0xf]
      %v1094 = vld [vmem:[%s2 + $0x18] sm:$0xf]
      %v1095 = vld [vmem:[%s2 + $0x1c] sm:$0xf]
      %v1096 = vld [vmem:[%s2 + $0x20] sm:$0xf]
      %v1097 = vld [vmem:[%s2 + $0x24] sm:$0xf]
      %v1098 = vld [vmem:[%s2 + $0x28] sm:$0xf]
      %v1099 = vld [vmem:[%s2 + $0x2c] sm:$0xf]
      %v1100 = vld [vmem:[%s2 + $0x30] sm:$0xf]
      %v1101 = vld [vmem:[%s2 + $0x34] sm:$0xf]
      %v1102 = vld [vmem:[%s2 + $0x38] sm:$0xf]
      %v1103 = vld [vmem:[%s2 + $0x3c] sm:$0xf]
      %v1104 = vld [vmem:[#allocation3 + $0x1] sm:$0xff]
      %v1105 = vld [vmem:[#allocation3 + $0x9] sm:$0xff]
      %v1106 = vpack.c.bf16 %v1105, %v1104
      %s1107 = scalar_lea.vmem %s2, 64
      %v1108 = vld [vmem:[%s1107] sm:$0xf]
      %v1109 = vld [vmem:[%s1107 + $0x4] sm:$0xf]
      %v1110 = vld [vmem:[%s1107 + $0x8] sm:$0xf]
      %v1111 = vld [vmem:[%s1107 + $0xc] sm:$0xf]
      %v1112 = vld [vmem:[%s1107 + $0x10] sm:$0xf]
      %v1113 = vld [vmem:[%s1107 + $0x14] sm:$0xf]
      %v1114 = vld [vmem:[%s1107 + $0x18] sm:$0xf]
      %v1115 = vld [vmem:[%s1107 + $0x1c] sm:$0xf]
      %v1116 = vld [vmem:[%s1107 + $0x20] sm:$0xf]
      %v1117 = vld [vmem:[%s1107 + $0x24] sm:$0xf]
      %v1118 = vld [vmem:[%s1107 + $0x28] sm:$0xf]
      %v1119 = vld [vmem:[%s1107 + $0x2c] sm:$0xf]
      %v1120 = vld [vmem:[%s1107 + $0x30] sm:$0xf]
      %v1121 = vld [vmem:[%s1107 + $0x34] sm:$0xf]
      %v1122 = vld [vmem:[%s1107 + $0x38] sm:$0xf]
      %v1123 = vld [vmem:[%s1107 + $0x3c] sm:$0xf]
      %v1140 = vunpack.c.l.b16 %v1108
      %v1141 = vunpack.c.l.b16 %v1109
      %v1142 = vunpack.c.l.b16 %v1110
      %v1143 = vunpack.c.l.b16 %v1111
      %v1144 = vunpack.c.l.b16 %v1112
      %v1145 = vunpack.c.l.b16 %v1113
      %v1146 = vunpack.c.l.b16 %v1114
      %v1147 = vunpack.c.l.b16 %v1115
      %v1148 = vunpack.c.l.b16 %v1116
      %v1149 = vunpack.c.l.b16 %v1117
      %v1150 = vunpack.c.l.b16 %v1118
      %v1151 = vunpack.c.l.b16 %v1119
      %v1152 = vunpack.c.l.b16 %v1120
      %v1153 = vunpack.c.l.b16 %v1121
      %v1154 = vunpack.c.l.b16 %v1122
      %v1155 = vunpack.c.l.b16 %v1123
      %v1156 = vpack.c.b16 %v1141, %v1140
      %v1157 = vpack.c.b16 %v1143, %v1142
      %v1158 = vpack.c.b16 %v1145, %v1144
      %v1159 = vpack.c.b16 %v1147, %v1146
      %v1160 = vpack.c.b16 %v1149, %v1148
      %v1161 = vpack.c.b16 %v1151, %v1150
      %v1162 = vpack.c.b16 %v1153, %v1152
      %v1163 = vpack.c.b16 %v1155, %v1154
      %1172 = vmatprep.subr.bf16.mxu0 0
      %1173 = vmatpush1.bf16.msra.mxu0 %v1163
      %1174 = vmatprep.subr.bf16.mxu0 0
      %1175 = vmatpush1.bf16.msra.mxu0 %v1162
      %1176 = vmatprep.subr.bf16.mxu0 0
      %1177 = vmatpush1.bf16.msra.mxu0 %v1161
      %1178 = vmatprep.subr.bf16.mxu0 0
      %1179 = vmatpush1.bf16.msra.mxu0 %v1160
      %1180 = vmatprep.subr.bf16.mxu0 0
      %1181 = vmatpush1.bf16.msra.mxu0 %v1159
      %1182 = vmatprep.subr.bf16.mxu0 0
      %1183 = vmatpush1.bf16.msra.mxu0 %v1158
      %1184 = vmatprep.subr.bf16.mxu0 0
      %1185 = vmatpush1.bf16.msra.mxu0 %v1157
      %1186 = vmatprep.subr.bf16.mxu0 0
      %1187 = vmatpush1.bf16.msra.mxu0 %v1156
      %1188 = vmatprep.subr.bf16.mxu0 0
      %1189 = vmatpush2.bf16.msra.mxu0 0
      %1190 = vmatprep.subr.bf16.mxu0 0
      %1191 = vmatpush2.bf16.msra.mxu0 0
      %1192 = vmatprep.subr.bf16.mxu0 0
      %1193 = vmatpush2.bf16.msra.mxu0 0
      %1194 = vmatprep.subr.bf16.mxu0 0
      %1195 = vmatpush2.bf16.msra.mxu0 0
      %1196 = vmatprep.subr.bf16.mxu0 0
      %1197 = vmatpush2.bf16.msra.mxu0 0
      %1198 = vmatprep.subr.bf16.mxu0 0
      %1199 = vmatpush2.bf16.msra.mxu0 0
      %1200 = vmatprep.subr.bf16.mxu0 0
      %1201 = vmatpush2.bf16.msra.mxu0 0
      %1202 = vmatprep.subr.bf16.mxu0 0
      %1203 = vmatpush2.bf16.msra.mxu0 0
      %1204 = vmatprep.mubr.bf16.mxu0 0
      %1205 = vmatmul.mubr.bf16.gmra.mxu0 %v1106
      %v1206 = vpop.f32.mrf.mxu0
      %v1207 = vadd.f32 0.0, %v1206
      %v1208 = vpop.f32.mrf.mxu0
      %v1209 = vpop.f32.mrf.mxu0
      %v1210 = vadd.f32 0.0, %v1209
      %v1211 = vpop.f32.mrf.mxu0
      %1212 = vdwg.mxu0
      %v1229 = vunpack.c.l.b16 %v1088
      %v1230 = vunpack.c.l.b16 %v1089
      %v1231 = vunpack.c.l.b16 %v1090
      %v1232 = vunpack.c.l.b16 %v1091
      %v1233 = vunpack.c.l.b16 %v1092
      %v1234 = vunpack.c.l.b16 %v1093
      %v1235 = vunpack.c.l.b16 %v1094
      %v1236 = vunpack.c.l.b16 %v1095
      %v1237 = vunpack.c.l.b16 %v1096
      %v1238 = vunpack.c.l.b16 %v1097
      %v1239 = vunpack.c.l.b16 %v1098
      %v1240 = vunpack.c.l.b16 %v1099
      %v1241 = vunpack.c.l.b16 %v1100
      %v1242 = vunpack.c.l.b16 %v1101
      %v1243 = vunpack.c.l.b16 %v1102
      %v1244 = vunpack.c.l.b16 %v1103
      %v1245 = vpack.c.b16 %v1230, %v1229
      %v1246 = vpack.c.b16 %v1232, %v1231
      %v1247 = vpack.c.b16 %v1234, %v1233
      %v1248 = vpack.c.b16 %v1236, %v1235
      %v1249 = vpack.c.b16 %v1238, %v1237
      %v1250 = vpack.c.b16 %v1240, %v1239
      %v1251 = vpack.c.b16 %v1242, %v1241
      %v1252 = vpack.c.b16 %v1244, %v1243
      %1261 = vmatprep.subr.bf16.mxu0 0
      %1262 = vmatpush1.bf16.msra.mxu0 %v1252
      %1263 = vmatprep.subr.bf16.mxu0 0
      %1264 = vmatpush1.bf16.msra.mxu0 %v1251
      %1265 = vmatprep.subr.bf16.mxu0 0
      %1266 = vmatpush1.bf16.msra.mxu0 %v1250
      %1267 = vmatprep.subr.bf16.mxu0 0
      %1268 = vmatpush1.bf16.msra.mxu0 %v1249
      %1269 = vmatprep.subr.bf16.mxu0 0
      %1270 = vmatpush1.bf16.msra.mxu0 %v1248
      %1271 = vmatprep.subr.bf16.mxu0 0
      %1272 = vmatpush1.bf16.msra.mxu0 %v1247
      %1273 = vmatprep.subr.bf16.mxu0 0
      %1274 = vmatpush1.bf16.msra.mxu0 %v1246
      %1275 = vmatprep.subr.bf16.mxu0 0
      %1276 = vmatpush1.bf16.msra.mxu0 %v1245
      %1277 = vmatprep.subr.bf16.mxu0 0
      %1278 = vmatpush2.bf16.msra.mxu0 0
      %1279 = vmatprep.subr.bf16.mxu0 0
      %1280 = vmatpush2.bf16.msra.mxu0 0
      %1281 = vmatprep.subr.bf16.mxu0 0
      %1282 = vmatpush2.bf16.msra.mxu0 0
      %1283 = vmatprep.subr.bf16.mxu0 0
      %1284 = vmatpush2.bf16.msra.mxu0 0
      %1285 = vmatprep.subr.bf16.mxu0 0
      %1286 = vmatpush2.bf16.msra.mxu0 0
      %1287 = vmatprep.subr.bf16.mxu0 0
      %1288 = vmatpush2.bf16.msra.mxu0 0
      %1289 = vmatprep.subr.bf16.mxu0 0
      %1290 = vmatpush2.bf16.msra.mxu0 0
      %1291 = vmatprep.subr.bf16.mxu0 0
      %1292 = vmatpush2.bf16.msra.mxu0 0
      %1293 = vmatprep.mubr.bf16.mxu0 0
      %1294 = vmatmul.mubr.bf16.gmra.mxu0 %v1087
      %v1295 = vpop.f32.mrf.mxu0
      %v1296 = vadd.f32 %v1207, %v1295
      %v1297 = vpop.f32.mrf.mxu0
      %v1298 = vpop.f32.mrf.mxu0
      %v1299 = vadd.f32 %v1210, %v1298
      %v1300 = vpop.f32.mrf.mxu0
      %1301 = vdwg.mxu0
      %v1302 = vld [vmem:[#allocation3 + $0x2] sm:$0xff]
      %v1303 = vld [vmem:[#allocation3 + $0xa] sm:$0xff]
      %v1304 = vpack.c.bf16 %v1303, %v1302
      %s1305 = scalar_lea.vmem %s2, 128
      %v1306 = vld [vmem:[%s1305] sm:$0xf]
      %v1307 = vld [vmem:[%s1305 + $0x4] sm:$0xf]
      %v1308 = vld [vmem:[%s1305 + $0x8] sm:$0xf]
      %v1309 = vld [vmem:[%s1305 + $0xc] sm:$0xf]
      %v1310 = vld [vmem:[%s1305 + $0x10] sm:$0xf]
      %v1311 = vld [vmem:[%s1305 + $0x14] sm:$0xf]
      %v1312 = vld [vmem:[%s1305 + $0x18] sm:$0xf]
      %v1313 = vld [vmem:[%s1305 + $0x1c] sm:$0xf]
      %v1314 = vld [vmem:[%s1305 + $0x20] sm:$0xf]
      %v1315 = vld [vmem:[%s1305 + $0x24] sm:$0xf]
      %v1316 = vld [vmem:[%s1305 + $0x28] sm:$0xf]
      %v1317 = vld [vmem:[%s1305 + $0x2c] sm:$0xf]
      %v1318 = vld [vmem:[%s1305 + $0x30] sm:$0xf]
      %v1319 = vld [vmem:[%s1305 + $0x34] sm:$0xf]
      %v1320 = vld [vmem:[%s1305 + $0x38] sm:$0xf]
      %v1321 = vld [vmem:[%s1305 + $0x3c] sm:$0xf]
      %v1338 = vunpack.c.l.b16 %v1306
      %v1339 = vunpack.c.l.b16 %v1307
      %v1340 = vunpack.c.l.b16 %v1308
      %v1341 = vunpack.c.l.b16 %v1309
      %v1342 = vunpack.c.l.b16 %v1310
      %v1343 = vunpack.c.l.b16 %v1311
      %v1344 = vunpack.c.l.b16 %v1312
      %v1345 = vunpack.c.l.b16 %v1313
      %v1346 = vunpack.c.l.b16 %v1314
      %v1347 = vunpack.c.l.b16 %v1315
      %v1348 = vunpack.c.l.b16 %v1316
      %v1349 = vunpack.c.l.b16 %v1317
      %v1350 = vunpack.c.l.b16 %v1318
      %v1351 = vunpack.c.l.b16 %v1319
      %v1352 = vunpack.c.l.b16 %v1320
      %v1353 = vunpack.c.l.b16 %v1321
      %v1354 = vpack.c.b16 %v1339, %v1338
      %v1355 = vpack.c.b16 %v1341, %v1340
      %v1356 = vpack.c.b16 %v1343, %v1342
      %v1357 = vpack.c.b16 %v1345, %v1344
      %v1358 = vpack.c.b16 %v1347, %v1346
      %v1359 = vpack.c.b16 %v1349, %v1348
      %v1360 = vpack.c.b16 %v1351, %v1350
      %v1361 = vpack.c.b16 %v1353, %v1352
      %1370 = vmatprep.subr.bf16.mxu0 0
      %1371 = vmatpush1.bf16.msra.mxu0 %v1361
      %1372 = vmatprep.subr.bf16.mxu0 0
      %1373 = vmatpush1.bf16.msra.mxu0 %v1360
      %1374 = vmatprep.subr.bf16.mxu0 0
      %1375 = vmatpush1.bf16.msra.mxu0 %v1359
      %1376 = vmatprep.subr.bf16.mxu0 0
      %1377 = vmatpush1.bf16.msra.mxu0 %v1358
      %1378 = vmatprep.subr.bf16.mxu0 0
      %1379 = vmatpush1.bf16.msra.mxu0 %v1357
      %1380 = vmatprep.subr.bf16.mxu0 0
      %1381 = vmatpush1.bf16.msra.mxu0 %v1356
      %1382 = vmatprep.subr.bf16.mxu0 0
      %1383 = vmatpush1.bf16.msra.mxu0 %v1355
      %1384 = vmatprep.subr.bf16.mxu0 0
      %1385 = vmatpush1.bf16.msra.mxu0 %v1354
      %1386 = vmatprep.subr.bf16.mxu0 0
      %1387 = vmatpush2.bf16.msra.mxu0 0
      %1388 = vmatprep.subr.bf16.mxu0 0
      %1389 = vmatpush2.bf16.msra.mxu0 0
      %1390 = vmatprep.subr.bf16.mxu0 0
      %1391 = vmatpush2.bf16.msra.mxu0 0
      %1392 = vmatprep.subr.bf16.mxu0 0
      %1393 = vmatpush2.bf16.msra.mxu0 0
      %1394 = vmatprep.subr.bf16.mxu0 0
      %1395 = vmatpush2.bf16.msra.mxu0 0
      %1396 = vmatprep.subr.bf16.mxu0 0
      %1397 = vmatpush2.bf16.msra.mxu0 0
      %1398 = vmatprep.subr.bf16.mxu0 0
      %1399 = vmatpush2.bf16.msra.mxu0 0
      %1400 = vmatprep.subr.bf16.mxu0 0
      %1401 = vmatpush2.bf16.msra.mxu0 0
      %1402 = vmatprep.mubr.bf16.mxu0 0
      %1403 = vmatmul.mubr.bf16.gmra.mxu0 %v1304
      %v1404 = vpop.f32.mrf.mxu0
      %v1405 = vadd.f32 0.0, %v1404
      %v1406 = vpop.f32.mrf.mxu0
      %v1407 = vpop.f32.mrf.mxu0
      %v1408 = vadd.f32 0.0, %v1407
      %v1409 = vpop.f32.mrf.mxu0
      %1410 = vdwg.mxu0
      %v1411 = vadd.f32 %v1296, %v1405
      %v1412 = vadd.f32 %v1299, %v1408
      %v1413 = vadd.f32 %v1411, %v1412
      %v1414 = vrot.slane %v1413, 4
      %v1415 = vadd.f32 %v1413, %v1414
      %v1416 = vrot.slane %v1415, 2
      %v1417 = vadd.f32 %v1415, %v1416
      %v1418 = vrot.slane %v1417, 1
      %v1419 = vadd.f32 %v1417, %v1418
      %1420 = vmatprep.subr.mxu0 0.0
      %1421 = vmatpush1.msra.mxu0 %v735
      %1422 = vmatprep.subr.mxu0 0.0
      %1423 = vmatpush1.msra.mxu0 %v734
      %1424 = vmatprep.subr.mxu0 0.0
      %1425 = vmatpush1.msra.mxu0 %v733
      %1426 = vmatprep.subr.mxu0 0.0
      %1427 = vmatpush1.msra.mxu0 %v732
      %1428 = vmatprep.subr.mxu0 0.0
      %1429 = vmatpush1.msra.mxu0 %v731
      %1430 = vmatprep.subr.mxu0 0.0
      %1431 = vmatpush1.msra.mxu0 %v730
      %1432 = vmatprep.subr.mxu0 0.0
      %1433 = vmatpush1.msra.mxu0 %v729
      %1434 = vmatprep.subr.mxu0 0.0
      %1435 = vmatpush1.msra.mxu0 %v728
      %1436 = vmatprep.subr.mxu0 0.0
      %1437 = vmatpush1.msra.mxu0 %v727
      %1438 = vmatprep.subr.mxu0 0.0
      %1439 = vmatpush1.msra.mxu0 %v726
      %1440 = vmatprep.subr.mxu0 0.0
      %1441 = vmatpush1.msra.mxu0 %v725
      %1442 = vmatprep.subr.mxu0 0.0
      %1443 = vmatpush1.msra.mxu0 %v724
      %1444 = vmatprep.subr.mxu0 0.0
      %1445 = vmatpush1.msra.mxu0 %v723
      %1446 = vmatprep.subr.mxu0 0.0
      %1447 = vmatpush1.msra.mxu0 %v722
      %1448 = vmatprep.subr.mxu0 0.0
      %1449 = vmatpush1.msra.mxu0 %v721
      %1450 = vmatprep.subr.mxu0 0.0
      %1451 = vmatpush1.msra.mxu0 %v720
      %1452 = vmatprep.subr.mxu0 0.0
      %1453 = vmatpush2.msra.mxu0 0.0
      %1454 = vmatprep.subr.mxu0 0.0
      %1455 = vmatpush2.msra.mxu0 0.0
      %1456 = vmatprep.subr.mxu0 0.0
      %1457 = vmatpush2.msra.mxu0 0.0
      %1458 = vmatprep.subr.mxu0 0.0
      %1459 = vmatpush2.msra.mxu0 0.0
      %1460 = vmatprep.subr.mxu0 0.0
      %1461 = vmatpush2.msra.mxu0 0.0
      %1462 = vmatprep.subr.mxu0 0.0
      %1463 = vmatpush2.msra.mxu0 0.0
      %1464 = vmatprep.subr.mxu0 0.0
      %1465 = vmatpush2.msra.mxu0 0.0
      %1466 = vmatprep.subr.mxu0 0.0
      %1467 = vmatpush2.msra.mxu0 0.0
      %1468 = vmatprep.subr.mxu0 0.0
      %1469 = vmatpush2.msra.mxu0 0.0
      %1470 = vmatprep.subr.mxu0 0.0
      %1471 = vmatpush2.msra.mxu0 0.0
      %1472 = vmatprep.subr.mxu0 0.0
      %1473 = vmatpush2.msra.mxu0 0.0
      %1474 = vmatprep.subr.mxu0 0.0
      %1475 = vmatpush2.msra.mxu0 0.0
      %1476 = vmatprep.subr.mxu0 0.0
      %1477 = vmatpush2.msra.mxu0 0.0
      %1478 = vmatprep.subr.mxu0 0.0
      %1479 = vmatpush2.msra.mxu0 0.0
      %1480 = vmatprep.subr.mxu0 0.0
      %1481 = vmatpush2.msra.mxu0 0.0
      %1482 = vmatprep.subr.mxu0 0.0
      %1483 = vmatpush2.msra.mxu0 0.0
      %1484 = vmatprep.mubr.f32.mxu0 0.0
      %1485 = vmatmul.mubr.f32.gmra.mxu0 %v1419
      %v1486 = vpop.f32.mrf.mxu0
      %v1487 = vadd.f32 0.0, %v1486
      %v1488 = vpop.f32.mrf.mxu0
      %1489 = vdwg.mxu0
      %v1490 = vmul.f32 %v1487, 0.00390625
      %v1492 = vsel %vm829, %v1490, 0
      %1494 = vmatprep.subr.mxu0 0.0
      %1495 = vmatpush1.msra.mxu0 0.0
      %1496 = vmatprep.subr.mxu0 0.0
      %1497 = vmatpush1.msra.mxu0 0.0
      %1498 = vmatprep.subr.mxu0 0.0
      %1499 = vmatpush1.msra.mxu0 0.0
      %1500 = vmatprep.subr.mxu0 0.0
      %1501 = vmatpush1.msra.mxu0 0.0
      %1502 = vmatprep.subr.mxu0 0.0
      %1503 = vmatpush1.msra.mxu0 0.0
      %1504 = vmatprep.subr.mxu0 0.0
      %1505 = vmatpush1.msra.mxu0 0.0
      %1506 = vmatprep.subr.mxu0 0.0
      %1507 = vmatpush1.msra.mxu0 0.0
      %1508 = vmatprep.subr.mxu0 0.0
      %1509 = vmatpush1.msra.mxu0 0.0
      %1510 = vmatprep.subr.mxu0 0.0
      %1511 = vmatpush1.msra.mxu0 0.0
      %1512 = vmatprep.subr.mxu0 0.0
      %1513 = vmatpush1.msra.mxu0 0.0
      %1514 = vmatprep.subr.mxu0 0.0
      %1515 = vmatpush1.msra.mxu0 0.0
      %1516 = vmatprep.subr.mxu0 0.0
      %1517 = vmatpush1.msra.mxu0 0.0
      %1518 = vmatprep.subr.mxu0 0.0
      %1519 = vmatpush1.msra.mxu0 0.0
      %1520 = vmatprep.subr.mxu0 0.0
      %1521 = vmatpush1.msra.mxu0 0.0
      %1522 = vmatprep.subr.mxu0 0.0
      %1523 = vmatpush1.msra.mxu0 0.0
      %1524 = vmatprep.subr.mxu0 0.0
      %1525 = vmatpush1.msra.mxu0 %v750
      %1526 = vmatprep.subr.mxu0 0.0
      %1527 = vmatpush2.msra.mxu0 0.0
      %1528 = vmatprep.subr.mxu0 0.0
      %1529 = vmatpush2.msra.mxu0 0.0
      %1530 = vmatprep.subr.mxu0 0.0
      %1531 = vmatpush2.msra.mxu0 0.0
      %1532 = vmatprep.subr.mxu0 0.0
      %1533 = vmatpush2.msra.mxu0 0.0
      %1534 = vmatprep.subr.mxu0 0.0
      %1535 = vmatpush2.msra.mxu0 0.0
      %1536 = vmatprep.subr.mxu0 0.0
      %1537 = vmatpush2.msra.mxu0 0.0
      %1538 = vmatprep.subr.mxu0 0.0
      %1539 = vmatpush2.msra.mxu0 0.0
      %1540 = vmatprep.subr.mxu0 0.0
      %1541 = vmatpush2.msra.mxu0 0.0
      %1542 = vmatprep.subr.mxu0 0.0
      %1543 = vmatpush2.msra.mxu0 0.0
      %1544 = vmatprep.subr.mxu0 0.0
      %1545 = vmatpush2.msra.mxu0 0.0
      %1546 = vmatprep.subr.mxu0 0.0
      %1547 = vmatpush2.msra.mxu0 0.0
      %1548 = vmatprep.subr.mxu0 0.0
      %1549 = vmatpush2.msra.mxu0 0.0
      %1550 = vmatprep.subr.mxu0 0.0
      %1551 = vmatpush2.msra.mxu0 0.0
      %1552 = vmatprep.subr.mxu0 0.0
      %1553 = vmatpush2.msra.mxu0 0.0
      %1554 = vmatprep.subr.mxu0 0.0
      %1555 = vmatpush2.msra.mxu0 0.0
      %1556 = vmatprep.subr.mxu0 0.0
      %1557 = vmatpush2.msra.mxu0 0.0
      %1558 = vmatprep.mubr.f32.mxu0 0.0
      %1559 = vmatmul.mubr.f32.gmra.mxu0 %v1492
      %v1560 = vpop.f32.mrf.mxu0
      %v1561 = vadd.f32 0.0, %v1560
      %v1562 = vpop.f32.mrf.mxu0
      %1563 = vdwg.mxu0
      %v1564 = vlaneseq
      %v1565 = vshrl.u32 %v1564, 7
      %v1566 = vsub.s32 0, %v1565
      %v1567 = vrot.slane %v1561, %v1566
      %v1568 = vsub.f32 %v1411, %v1567
      %v1569 = vsub.f32 %v1412, %v1567
      %v1570 = vmul.f32 %v1568, %v1568
      %v1571 = vmul.f32 %v1569, %v1569
      %v1572 = vadd.f32 %v1570, %v1571
      %v1573 = vrot.slane %v1572, 4
      %v1574 = vadd.f32 %v1572, %v1573
      %v1575 = vrot.slane %v1574, 2
      %v1576 = vadd.f32 %v1574, %v1575
      %v1577 = vrot.slane %v1576, 1
      %v1578 = vadd.f32 %v1576, %v1577
      %1579 = vmatprep.subr.mxu0 0.0
      %1580 = vmatpush1.msra.mxu0 %v735
      %1581 = vmatprep.subr.mxu0 0.0
      %1582 = vmatpush1.msra.mxu0 %v734
      %1583 = vmatprep.subr.mxu0 0.0
      %1584 = vmatpush1.msra.mxu0 %v733
      %1585 = vmatprep.subr.mxu0 0.0
      %1586 = vmatpush1.msra.mxu0 %v732
      %1587 = vmatprep.subr.mxu0 0.0
      %1588 = vmatpush1.msra.mxu0 %v731
      %1589 = vmatprep.subr.mxu0 0.0
      %1590 = vmatpush1.msra.mxu0 %v730
      %1591 = vmatprep.subr.mxu0 0.0
      %1592 = vmatpush1.msra.mxu0 %v729
      %1593 = vmatprep.subr.mxu0 0.0
      %1594 = vmatpush1.msra.mxu0 %v728
      %1595 = vmatprep.subr.mxu0 0.0
      %1596 = vmatpush1.msra.mxu0 %v727
      %1597 = vmatprep.subr.mxu0 0.0
      %1598 = vmatpush1.msra.mxu0 %v726
      %1599 = vmatprep.subr.mxu0 0.0
      %1600 = vmatpush1.msra.mxu0 %v725
      %1601 = vmatprep.subr.mxu0 0.0
      %1602 = vmatpush1.msra.mxu0 %v724
      %1603 = vmatprep.subr.mxu0 0.0
      %1604 = vmatpush1.msra.mxu0 %v723
      %1605 = vmatprep.subr.mxu0 0.0
      %1606 = vmatpush1.msra.mxu0 %v722
      %1607 = vmatprep.subr.mxu0 0.0
      %1608 = vmatpush1.msra.mxu0 %v721
      %1609 = vmatprep.subr.mxu0 0.0
      %1610 = vmatpush1.msra.mxu0 %v720
      %1611 = vmatprep.subr.mxu0 0.0
      %1612 = vmatpush2.msra.mxu0 0.0
      %1613 = vmatprep.subr.mxu0 0.0
      %1614 = vmatpush2.msra.mxu0 0.0
      %1615 = vmatprep.subr.mxu0 0.0
      %1616 = vmatpush2.msra.mxu0 0.0
      %1617 = vmatprep.subr.mxu0 0.0
      %1618 = vmatpush2.msra.mxu0 0.0
      %1619 = vmatprep.subr.mxu0 0.0
      %1620 = vmatpush2.msra.mxu0 0.0
      %1621 = vmatprep.subr.mxu0 0.0
      %1622 = vmatpush2.msra.mxu0 0.0
      %1623 = vmatprep.subr.mxu0 0.0
      %1624 = vmatpush2.msra.mxu0 0.0
      %1625 = vmatprep.subr.mxu0 0.0
      %1626 = vmatpush2.msra.mxu0 0.0
      %1627 = vmatprep.subr.mxu0 0.0
      %1628 = vmatpush2.msra.mxu0 0.0
      %1629 = vmatprep.subr.mxu0 0.0
      %1630 = vmatpush2.msra.mxu0 0.0
      %1631 = vmatprep.subr.mxu0 0.0
      %1632 = vmatpush2.msra.mxu0 0.0
      %1633 = vmatprep.subr.mxu0 0.0
      %1634 = vmatpush2.msra.mxu0 0.0
      %1635 = vmatprep.subr.mxu0 0.0
      %1636 = vmatpush2.msra.mxu0 0.0
      %1637 = vmatprep.subr.mxu0 0.0
      %1638 = vmatpush2.msra.mxu0 0.0
      %1639 = vmatprep.subr.mxu0 0.0
      %1640 = vmatpush2.msra.mxu0 0.0
      %1641 = vmatprep.subr.mxu0 0.0
      %1642 = vmatpush2.msra.mxu0 0.0
      %1643 = vmatprep.mubr.f32.mxu0 0.0
      %1644 = vmatmul.mubr.f32.gmra.mxu0 %v1578
      %v1645 = vpop.f32.mrf.mxu0
      %v1646 = vadd.f32 0.0, %v1645
      %v1647 = vpop.f32.mrf.mxu0
      %1648 = vdwg.mxu0
      %v1649 = vmul.f32 %v1646, 0.00390625
      %v1650 = vadd.f32 %v1649, 1e-05
      %v1651 = vrsqrt.pop %v1650
      %v1653 = vsel %vm829, %v1651, 0
      %1655 = vmatprep.subr.mxu0 0.0
      %1656 = vmatpush1.msra.mxu0 0.0
      %1657 = vmatprep.subr.mxu0 0.0
      %1658 = vmatpush1.msra.mxu0 0.0
      %1659 = vmatprep.subr.mxu0 0.0
      %1660 = vmatpush1.msra.mxu0 0.0
      %1661 = vmatprep.subr.mxu0 0.0
      %1662 = vmatpush1.msra.mxu0 0.0
      %1663 = vmatprep.subr.mxu0 0.0
      %1664 = vmatpush1.msra.mxu0 0.0
      %1665 = vmatprep.subr.mxu0 0.0
      %1666 = vmatpush1.msra.mxu0 0.0
      %1667 = vmatprep.subr.mxu0 0.0
      %1668 = vmatpush1.msra.mxu0 0.0
      %1669 = vmatprep.subr.mxu0 0.0
      %1670 = vmatpush1.msra.mxu0 0.0
      %1671 = vmatprep.subr.mxu0 0.0
      %1672 = vmatpush1.msra.mxu0 0.0
      %1673 = vmatprep.subr.mxu0 0.0
      %1674 = vmatpush1.msra.mxu0 0.0
      %1675 = vmatprep.subr.mxu0 0.0
      %1676 = vmatpush1.msra.mxu0 0.0
      %1677 = vmatprep.subr.mxu0 0.0
      %1678 = vmatpush1.msra.mxu0 0.0
      %1679 = vmatprep.subr.mxu0 0.0
      %1680 = vmatpush1.msra.mxu0 0.0
      %1681 = vmatprep.subr.mxu0 0.0
      %1682 = vmatpush1.msra.mxu0 0.0
      %1683 = vmatprep.subr.mxu0 0.0
      %1684 = vmatpush1.msra.mxu0 0.0
      %1685 = vmatprep.subr.mxu0 0.0
      %1686 = vmatpush1.msra.mxu0 %v750
      %1687 = vmatprep.subr.mxu0 0.0
      %1688 = vmatpush2.msra.mxu0 0.0
      %1689 = vmatprep.subr.mxu0 0.0
      %1690 = vmatpush2.msra.mxu0 0.0
      %1691 = vmatprep.subr.mxu0 0.0
      %1692 = vmatpush2.msra.mxu0 0.0
      %1693 = vmatprep.subr.mxu0 0.0
      %1694 = vmatpush2.msra.mxu0 0.0
      %1695 = vmatprep.subr.mxu0 0.0
      %1696 = vmatpush2.msra.mxu0 0.0
      %1697 = vmatprep.subr.mxu0 0.0
      %1698 = vmatpush2.msra.mxu0 0.0
      %1699 = vmatprep.subr.mxu0 0.0
      %1700 = vmatpush2.msra.mxu0 0.0
      %1701 = vmatprep.subr.mxu0 0.0
      %1702 = vmatpush2.msra.mxu0 0.0
      %1703 = vmatprep.subr.mxu0 0.0
      %1704 = vmatpush2.msra.mxu0 0.0
      %1705 = vmatprep.subr.mxu0 0.0
      %1706 = vmatpush2.msra.mxu0 0.0
      %1707 = vmatprep.subr.mxu0 0.0
      %1708 = vmatpush2.msra.mxu0 0.0
      %1709 = vmatprep.subr.mxu0 0.0
      %1710 = vmatpush2.msra.mxu0 0.0
      %1711 = vmatprep.subr.mxu0 0.0
      %1712 = vmatpush2.msra.mxu0 0.0
      %1713 = vmatprep.subr.mxu0 0.0
      %1714 = vmatpush2.msra.mxu0 0.0
      %1715 = vmatprep.subr.mxu0 0.0
      %1716 = vmatpush2.msra.mxu0 0.0
      %1717 = vmatprep.subr.mxu0 0.0
      %1718 = vmatpush2.msra.mxu0 0.0
      %1719 = vmatprep.mubr.f32.mxu0 0.0
      %1720 = vmatmul.mubr.f32.gmra.mxu0 %v1653
      %v1721 = vpop.f32.mrf.mxu0
      %v1722 = vadd.f32 0.0, %v1721
      %v1723 = vpop.f32.mrf.mxu0
      %1724 = vdwg.mxu0
      %v1725 = vld [vmem:[%s4] sm:$0x1]
      %v1726 = vmul.f32 %v1722, %v1725
      %v1727 = vlaneseq
      %v1728 = vshrl.u32 %v1727, 7
      %v1729 = vsub.s32 0, %v1728
      %v1730 = vrot.slane %v1726, %v1729
      %v1731 = vmul.f32 %v1568, %v1730
      %v1732 = vmul.f32 %v1569, %v1730
      %v1733 = vld [vmem:[%s4 + $0x1] sm:$0x1]
      %v1734 = vlaneseq
      %v1735 = vshrl.u32 %v1734, 7
      %v1736 = vsub.s32 0, %v1735
      %v1737 = vrot.slane %v1733, %v1736
      %v1738 = vadd.f32 %v1731, %v1737
      %v1739 = vadd.f32 %v1732, %v1737
      %v1740 = vmax.f32 %v1738, 0.0
      %v1741 = vmax.f32 %v1739, 0.0
      %1742 = vst [vmem:[%s224] sm:$0xff] %v1740
      %1743 = vst [vmem:[%s224 + $0x8] sm:$0xff] %v1741
      %p1744 = scmp.lt.s32.totalorder %s16, 1
      %s1745 = scalar_select %p1744, %s16, 1
      %s1746 = smul.addr %s1745, 2
      %s1747 = smul.addr %s1746, 8
      %s1748 = scalar_lea.vmem %s5, %s1747
      // Predicated region
      $region41: #{double_conv_in.1} parent=39 // pred_check
        %p1749 = pneg %p144
      $region42: #{double_conv_in.1} parent=39 // pred_check_branch
        %1751 = sbr.rel (%p1749) target = $region44
      $region43: #{double_conv_in.1} parent=39 // pred_region
        _
      $region44: #{double_conv_in.1} parent=39 // pred_fallthru
        _
    $region40: #{double_conv_in.1} parent=5 // pred_fallthru
      _
    %p1752 = scmp.le.s32.totalorder 2, %s11
    // Predicated region
    $region45: #{double_conv_in.1} parent=5 // pred_check
      %p1753 = pneg %p1752
    $region46: #{double_conv_in.1} parent=5 // pred_check_branch
      %1755 = sbr.rel (%p1753) target = $region48
    $region47: #{double_conv_in.1} parent=5 // pred_region
      %s1756 = ssub.s32 %s11, 2
      // Predicated region
      $region49: #{double_conv_in.1} parent=47 // pred_check
        %p1757 = pneg %p150
      $region50: #{double_conv_in.1} parent=47 // pred_check_branch
        %1759 = sbr.rel (%p1757) target = $region52
      $region51: #{double_conv_in.1} parent=47 // pred_region
        %p1760 = scmp.lt.s32.totalorder %s17, 1
        %s1761 = scalar_select %p1760, %s17, 1
        %s1762 = smul.addr %s1761, 2
        %s1763 = smul.addr %s1762, 8
        %s1764 = scalar_lea.vmem %s5, %s1763
      $region52: #{double_conv_in.1} parent=47 // pred_fallthru
        _
    $region48: #{double_conv_in.1} parent=5 // pred_fallthru
      _
  $region6: #{double_conv_in.1} parent=0 // loop_footer
    %s15 = sadd.s32 1, %s11
  $region7: #{double_conv_in.1} parent=0 // loop_footer_branch
    %10 = sbr.rel target = $region3
  $region8: #{double_conv_in.1} parent=0 // loop_exit
    _

</llo_original>
